<compile_context>
chip_gen: v6e
topology: v6e:2x2x1
jax: 0.10.0
libtpu: 0.0.40
codegen_flags: <defaults>
</compile_context>

<pallas_src>
import functools

import numpy as np
import jax
import jax.numpy as jnp
from jax import lax
from jax.experimental import pallas as pl
from jax.experimental.pallas import tpu as pltpu


# ----------------------------------------------------------------------------
# Pallas kernel: grouped 3x3 conv (padding=1) + folded BN bias + ReLU on a
# flattened (lane-dense) H*W axis; batch folded into sublanes; halo handled
# in-kernel via roll + precomputed border masks.
# ----------------------------------------------------------------------------
def _make_halo_masks(H, W):
    """(9, H*W) f32 masks: 1 where the tap (dh, dw) stays inside the image."""
    HW = H * W
    pos = np.arange(HW)
    row = pos // W
    col = pos % W
    masks = np.zeros((9, HW), np.float32)
    for kh in range(3):
        dh = kh - 1
        for kw in range(3):
            dw = kw - 1
            ok = ((row + dh >= 0) & (row + dh < H) &
                  (col + dw >= 0) & (col + dw < W))
            masks[kh * 3 + kw] = ok.astype(np.float32)
    return jnp.asarray(masks)


def _grouped_conv_bn_relu_kernel(x_ref, w_ref, b_ref, m_ref, o_ref, *, W):
    # x_ref: (B*Cin,  H*W)       VMEM -- batch folded into sublanes, lane-dense
    # w_ref: (B*Cout, 9*B*Cin)   VMEM -- BN-folded weight columns; zeros for
    #                                    rows not connected (other batch/group)
    # b_ref: (B*Cout, 1)         VMEM -- BN-folded bias column
    # m_ref: (9, H*W)            VMEM -- precomputed border masks per tap
    # o_ref: (B*Cout, H*W)       VMEM
    rows_in = x_ref.shape[0]

    # No up-front f32 cast: the f32 weight column / mask promotes the product,
    # so accumulation is f32 while a bf16 input would stay at half footprint.
    x = x_ref[...]
    acc = jnp.zeros(o_ref.shape, jnp.float32)

    for kh in range(3):
        for kw in range(3):
            dh, dw = kh - 1, kw - 1
            k = kh * 3 + kw
            off = dh * W + dw
            if off == 0:
                t = x
            else:
                # Shift so t[:, p] = x[:, p + off]; the mask zeroes the lanes
                # whose tap fell outside the image (wrap-around halo).
                # (The shift is the same for every sublane row, so folding
                # batch/channels into sublanes does not affect it.)
                t = jnp.roll(x, -off, axis=1) * m_ref[k:k + 1, :]
            base = k * rows_in
            for r in range(rows_in):
                # One dense broadcast-FMA over ALL output rows per input row.
                w_col = w_ref[:, base + r:base + r + 1]      # (B*Cout, 1) f32
                acc = acc + w_col * t[r:r + 1, :]

    # Single dense, unmasked store of the whole (B*Cout, H*W) tile.
    o_ref[...] = jnp.maximum(acc + b_ref[...], 0.0).astype(o_ref.dtype)


def grouped_conv_bn_relu(x, w_folded, b_folded, groups):
    """x: (B, Cin, H, W); w_folded: (Cout, Cin//groups, 3, 3); b_folded: (Cout,)."""
    B, Cin, H, W = x.shape
    Cout = w_folded.shape[0]
    HW = H * W
    cin_g = Cin // groups
    cout_g = Cout // groups
    rows_in, rows_out = B * Cin, B * Cout

    # Lane-dense layout: batch folded onto sublanes, spatial flattened onto
    # lanes -> (8, 256) at the reference shape.  Contiguous reshape, ~free.
    x2 = x.reshape(rows_in, HW)

    # Block-diagonal (over batch x group) weight-column bank so the kernel can
    # do one (B*Cout, HW) broadcast-FMA per (tap, input row).  ~2.3 KB f32.
    w9 = w_folded.reshape(groups, cout_g, cin_g, 9).astype(jnp.float32)
    eye_g = jnp.eye(groups, dtype=jnp.float32)
    wd = (w9[:, :, None, :, :] * eye_g[:, None, :, None, None]
          ).reshape(Cout, Cin, 9)                       # zero off-group
    eye_b = jnp.eye(B, dtype=jnp.float32)
    wfull = (wd[None, :, None, :, :] * eye_b[:, None, :, None, None]
             ).reshape(rows_out, rows_in, 9)            # zero off-batch
    wbank = jnp.transpose(wfull, (0, 2, 1)).reshape(rows_out, 9 * rows_in)
    bcol = jnp.tile(b_folded.astype(jnp.float32), B).reshape(rows_out, 1)
    masks = _make_halo_masks(H, W)                      # trace-time constants

    # NOTE: the in-kernel roll+mask halo requires the FULL H*W plane in one
    # block.  Never tile the lane (spatial) axis; scale by tiling batch or
    # channels if VMEM ever becomes a concern (v7x: 32 MiB scoped / 64 MiB).
    kernel = functools.partial(_grouped_conv_bn_relu_kernel, W=W)
    out = pl.pallas_call(
        kernel,
        out_shape=jax.ShapeDtypeStruct((rows_out, HW), x.dtype),
        # Single grid step: at this size the kernel is step-overhead bound, so
        # one step beats splitting batch across two v7x TensorCores.
        grid=(1,),
        in_specs=[
            pl.BlockSpec((rows_in, HW), lambda i: (0, 0)),
            pl.BlockSpec((rows_out, 9 * rows_in), lambda i: (0, 0)),
            pl.BlockSpec((rows_out, 1), lambda i: (0, 0)),
            pl.BlockSpec((9, HW), lambda i: (0, 0)),
        ],
        out_specs=pl.BlockSpec((rows_out, HW), lambda i: (0, 0)),
        compiler_params=pltpu.CompilerParams(
            dimension_semantics=("arbitrary",)),
    )(x2, wbank, bcol, masks)
    return out.reshape(B, Cout, H, W)


# ----------------------------------------------------------------------------
# Glue in plain JAX: adaptive average pooling and bilinear upsampling
# (expressed as tiny separable matrices applied with einsum), and the tiny
# pooled-branch convs via XLA's grouped conv (perf: a Pallas launch would be
# pure overhead at 2x2 / 4x4 spatial).
# ----------------------------------------------------------------------------
def _adaptive_pool_matrix(in_size, out_size):
    # Matches torch.nn.AdaptiveAvgPool2d bin boundaries.
    M = np.zeros((out_size, in_size), np.float32)
    for i in range(out_size):
        start = (i * in_size) // out_size
        end = -((-(i + 1) * in_size) // out_size)  # ceil
        M[i, start:end] = 1.0 / (end - start)
    return jnp.asarray(M)


def _bilinear_matrix(in_size, out_size):
    # Matches F.interpolate(mode='bilinear', align_corners=False).
    M = np.zeros((out_size, in_size), np.float32)
    if in_size == 1:
        M[:, 0] = 1.0
        return jnp.asarray(M)
    scale = in_size / out_size
    for o in range(out_size):
        src = max((o + 0.5) * scale - 0.5, 0.0)
        i0 = min(int(np.floor(src)), in_size - 1)
        i1 = min(i0 + 1, in_size - 1)
        l1 = src - i0
        M[o, i0] += 1.0 - l1
        M[o, i1] += l1
    return jnp.asarray(M)


def _small_conv_bn_relu(x, w_folded, b_folded, groups):
    # Tiny pooled-branch conv: route through XLA (see perf note at top).
    y = lax.conv_general_dilated(
        x, w_folded, window_strides=(1, 1), padding="SAME",
        dimension_numbers=("NCHW", "OIHW", "NCHW"),
        feature_group_count=groups)
    return jnp.maximum(y + b_folded[None, :, None, None], 0.0)


def spatial_concat_forward(x, params, bin_sizes, groups):
    """params: list of (w_folded, b_folded); params[0] is the reg_conv branch."""
    B, C, H, W = x.shape
    res = [grouped_conv_bn_relu(x, params[0][0], params[0][1], groups)]
    for idx, s in enumerate(bin_sizes):
        Ph = _adaptive_pool_matrix(H, s)
        Pw = _adaptive_pool_matrix(W, s)
        x_pooled = jnp.einsum("ih,jw,bchw->bcij", Ph, Pw, x)
        y = _small_conv_bn_relu(x_pooled, params[idx + 1][0],
                                params[idx + 1][1], groups)
        Mh = _bilinear_matrix(s, H)
        Mw = _bilinear_matrix(s, W)
        y_up = jnp.einsum("ih,jw,bchw->bcij", Mh, Mw, y)
        res.append(y_up)
    return jnp.concatenate(res, axis=1)


# ----------------------------------------------------------------------------
# Deterministic parameter setup (conv weight + BN folded into scale/bias)
# ----------------------------------------------------------------------------
def make_branch_params(key, in_channels, out_channels, groups):
    kw, kg, kb, km, kv = jax.random.split(key, 5)
    cin_g = in_channels // groups
    w = 0.2 * jax.random.normal(kw, (out_channels, cin_g, 3, 3), jnp.float32)
    gamma = 1.0 + 0.1 * jax.random.normal(kg, (out_channels,), jnp.float32)
    beta = 0.1 * jax.random.normal(kb, (out_channels,), jnp.float32)
    mean = 0.1 * jax.random.normal(km, (out_channels,), jnp.float32)
    var = jax.random.uniform(kv, (out_channels,), jnp.float32, minval=0.5,
                             maxval=1.5)
    scale = gamma / jnp.sqrt(var + 1e-5)
    w_folded = w * scale[:, None, None, None]
    b_folded = beta - mean * scale
    return w_folded, b_folded


def ref_conv_bn_relu(x, w_folded, b_folded, groups):
    y = lax.conv_general_dilated(
        x, w_folded, window_strides=(1, 1), padding="SAME",
        dimension_numbers=("NCHW", "OIHW", "NCHW"),
        feature_group_count=groups)
    return jnp.maximum(y + b_folded[None, :, None, None], 0.0)


if __name__ == "__main__":
    in_channels, out_channels, group_width = 4, 4, 2
    bin_sizes = (2, 4)
    groups = out_channels // group_width
    B, H, W = 2, 16, 16

    key = jax.random.PRNGKey(0)
    kx, kp = jax.random.split(key)
    x = jax.random.normal(kx, (B, in_channels, H, W), jnp.float32)

    branch_keys = jax.random.split(kp, 1 + len(bin_sizes))
    params = [make_branch_params(k, in_channels, out_channels, groups)
              for k in branch_keys]

    out = spatial_concat_forward(x, params, bin_sizes, groups)
    out = jax.block_until_ready(out)
    assert out.shape == (B, out_channels * (1 + len(bin_sizes)), H, W), out.shape

    # Regression test (per review): Pallas conv+BN+ReLU vs. XLA reference.
    got = jax.block_until_ready(
        grouped_conv_bn_relu(x, params[0][0], params[0][1], groups))
    ref = ref_conv_bn_relu(x, params[0][0], params[0][1], groups)
    assert jnp.allclose(got, ref, atol=1e-4, rtol=1e-4), "Pallas conv mismatch"

    print("KERNEL_OK")
</pallas_src>

<mosaic_0001>
module attributes {stable_mosaic.version = 11 : i64} {
  func.func @_grouped_conv_bn_relu_kernel(%arg0: i32, %arg1: memref<8x256xf32, #tpu.memory_space<vmem>>, %arg2: memref<8x72xf32, #tpu.memory_space<vmem>>, %arg3: memref<8x1xf32, #tpu.memory_space<vmem>>, %arg4: memref<9x256xf32, #tpu.memory_space<vmem>>, %arg5: memref<8x256xf32, #tpu.memory_space<vmem>>) attributes {dimension_semantics = [#tpu.dimension_semantics<arbitrary>], iteration_bounds = array<i64: 1>, scalar_prefetch = 0 : i64, scratch_operands = 0 : i64, tpu.core_type = #tpu.core_type<tc>, window_params = [{pipeline_mode = #tpu.pipeline_mode<synchronous>, transform_indices = @transform_0, window_bounds = array<i64: 8, 256>}, {pipeline_mode = #tpu.pipeline_mode<synchronous>, transform_indices = @transform_1, window_bounds = array<i64: 8, 72>}, {pipeline_mode = #tpu.pipeline_mode<synchronous>, transform_indices = @transform_2, window_bounds = array<i64: 8, 1>}, {pipeline_mode = #tpu.pipeline_mode<synchronous>, transform_indices = @transform_3, window_bounds = array<i64: 9, 256>}, {pipeline_mode = #tpu.pipeline_mode<synchronous>, transform_indices = @transform_4, window_bounds = array<i64: 8, 256>}]} {
    %c0 = arith.constant 0 : index
    %c0_0 = arith.constant 0 : index
    %0 = vector.load %arg1[%c0, %c0_0] : memref<8x256xf32, #tpu.memory_space<vmem>>, vector<8x256xf32>
    %cst = arith.constant 0.000000e+00 : f32
    %1 = vector.broadcast %cst : f32 to vector<8x256xf32>
    %2 = vector.extract_strided_slice %0 {offsets = [0, 239], sizes = [8, 17], strides = [1, 1]} : vector<8x256xf32> to vector<8x17xf32>
    %3 = vector.extract_strided_slice %0 {offsets = [0, 0], sizes = [8, 239], strides = [1, 1]} : vector<8x256xf32> to vector<8x239xf32>
    %4 = tpu.concatenate %2, %3 in 1 : vector<8x17xf32>, vector<8x239xf32> -> vector<8x256xf32>
    %c0_1 = arith.constant 0 : index
    %c0_2 = arith.constant 0 : index
    %5 = vector.load %arg4[%c0_1, %c0_2] : memref<9x256xf32, #tpu.memory_space<vmem>>, vector<1x256xf32>
    %6 = vector.broadcast %5 : vector<1x256xf32> to vector<8x256xf32>
    %7 = arith.mulf %4, %6 : vector<8x256xf32>
    %c0_3 = arith.constant 0 : index
    %c0_4 = arith.constant 0 : index
    %8 = vector.load %arg2[%c0_3, %c0_4] : memref<8x72xf32, #tpu.memory_space<vmem>>, vector<8x1xf32>
    %9 = vector.extract_strided_slice %7 {offsets = [0, 0], sizes = [1, 256], strides = [1, 1]} : vector<8x256xf32> to vector<1x256xf32>
    %10 = vector.broadcast %8 : vector<8x1xf32> to vector<8x256xf32>
    %11 = vector.broadcast %9 : vector<1x256xf32> to vector<8x256xf32>
    %12 = arith.mulf %10, %11 : vector<8x256xf32>
    %13 = arith.addf %1, %12 : vector<8x256xf32>
    %c0_5 = arith.constant 0 : index
    %c1 = arith.constant 1 : index
    %14 = vector.load %arg2[%c0_5, %c1] : memref<8x72xf32, #tpu.memory_space<vmem>>, vector<8x1xf32>
    %15 = vector.extract_strided_slice %7 {offsets = [1, 0], sizes = [1, 256], strides = [1, 1]} : vector<8x256xf32> to vector<1x256xf32>
    %16 = vector.broadcast %14 : vector<8x1xf32> to vector<8x256xf32>
    %17 = vector.broadcast %15 : vector<1x256xf32> to vector<8x256xf32>
    %18 = arith.mulf %16, %17 : vector<8x256xf32>
    %19 = arith.addf %13, %18 : vector<8x256xf32>
    %c0_6 = arith.constant 0 : index
    %c2 = arith.constant 2 : index
    %20 = vector.load %arg2[%c0_6, %c2] : memref<8x72xf32, #tpu.memory_space<vmem>>, vector<8x1xf32>
    %21 = vector.extract_strided_slice %7 {offsets = [2, 0], sizes = [1, 256], strides = [1, 1]} : vector<8x256xf32> to vector<1x256xf32>
    %22 = vector.broadcast %20 : vector<8x1xf32> to vector<8x256xf32>
    %23 = vector.broadcast %21 : vector<1x256xf32> to vector<8x256xf32>
    %24 = arith.mulf %22, %23 : vector<8x256xf32>
    %25 = arith.addf %19, %24 : vector<8x256xf32>
    %c0_7 = arith.constant 0 : index
    %c3 = arith.constant 3 : index
    %26 = vector.load %arg2[%c0_7, %c3] : memref<8x72xf32, #tpu.memory_space<vmem>>, vector<8x1xf32>
    %27 = vector.extract_strided_slice %7 {offsets = [3, 0], sizes = [1, 256], strides = [1, 1]} : vector<8x256xf32> to vector<1x256xf32>
    %28 = vector.broadcast %26 : vector<8x1xf32> to vector<8x256xf32>
    %29 = vector.broadcast %27 : vector<1x256xf32> to vector<8x256xf32>
    %30 = arith.mulf %28, %29 : vector<8x256xf32>
    %31 = arith.addf %25, %30 : vector<8x256xf32>
    %c0_8 = arith.constant 0 : index
    %c4 = arith.constant 4 : index
    %32 = vector.load %arg2[%c0_8, %c4] : memref<8x72xf32, #tpu.memory_space<vmem>>, vector<8x1xf32>
    %33 = vector.extract_strided_slice %7 {offsets = [4, 0], sizes = [1, 256], strides = [1, 1]} : vector<8x256xf32> to vector<1x256xf32>
    %34 = vector.broadcast %32 : vector<8x1xf32> to vector<8x256xf32>
    %35 = vector.broadcast %33 : vector<1x256xf32> to vector<8x256xf32>
    %36 = arith.mulf %34, %35 : vector<8x256xf32>
    %37 = arith.addf %31, %36 : vector<8x256xf32>
    %c0_9 = arith.constant 0 : index
    %c5 = arith.constant 5 : index
    %38 = vector.load %arg2[%c0_9, %c5] : memref<8x72xf32, #tpu.memory_space<vmem>>, vector<8x1xf32>
    %39 = vector.extract_strided_slice %7 {offsets = [5, 0], sizes = [1, 256], strides = [1, 1]} : vector<8x256xf32> to vector<1x256xf32>
    %40 = vector.broadcast %38 : vector<8x1xf32> to vector<8x256xf32>
    %41 = vector.broadcast %39 : vector<1x256xf32> to vector<8x256xf32>
    %42 = arith.mulf %40, %41 : vector<8x256xf32>
    %43 = arith.addf %37, %42 : vector<8x256xf32>
    %c0_10 = arith.constant 0 : index
    %c6 = arith.constant 6 : index
    %44 = vector.load %arg2[%c0_10, %c6] : memref<8x72xf32, #tpu.memory_space<vmem>>, vector<8x1xf32>
    %45 = vector.extract_strided_slice %7 {offsets = [6, 0], sizes = [1, 256], strides = [1, 1]} : vector<8x256xf32> to vector<1x256xf32>
    %46 = vector.broadcast %44 : vector<8x1xf32> to vector<8x256xf32>
    %47 = vector.broadcast %45 : vector<1x256xf32> to vector<8x256xf32>
    %48 = arith.mulf %46, %47 : vector<8x256xf32>
    %49 = arith.addf %43, %48 : vector<8x256xf32>
    %c0_11 = arith.constant 0 : index
    %c7 = arith.constant 7 : index
    %50 = vector.load %arg2[%c0_11, %c7] : memref<8x72xf32, #tpu.memory_space<vmem>>, vector<8x1xf32>
    %51 = vector.extract_strided_slice %7 {offsets = [7, 0], sizes = [1, 256], strides = [1, 1]} : vector<8x256xf32> to vector<1x256xf32>
    %52 = vector.broadcast %50 : vector<8x1xf32> to vector<8x256xf32>
    %53 = vector.broadcast %51 : vector<1x256xf32> to vector<8x256xf32>
    %54 = arith.mulf %52, %53 : vector<8x256xf32>
    %55 = arith.addf %49, %54 : vector<8x256xf32>
    %56 = vector.extract_strided_slice %0 {offsets = [0, 240], sizes = [8, 16], strides = [1, 1]} : vector<8x256xf32> to vector<8x16xf32>
    %57 = vector.extract_strided_slice %0 {offsets = [0, 0], sizes = [8, 240], strides = [1, 1]} : vector<8x256xf32> to vector<8x240xf32>
    %58 = tpu.concatenate %56, %57 in 1 : vector<8x16xf32>, vector<8x240xf32> -> vector<8x256xf32>
    %c1_12 = arith.constant 1 : index
    %c0_13 = arith.constant 0 : index
    %59 = vector.load %arg4[%c1_12, %c0_13] : memref<9x256xf32, #tpu.memory_space<vmem>>, vector<1x256xf32>
    %60 = vector.broadcast %59 : vector<1x256xf32> to vector<8x256xf32>
    %61 = arith.mulf %58, %60 : vector<8x256xf32>
    %c0_14 = arith.constant 0 : index
    %c8 = arith.constant 8 : index
    %62 = vector.load %arg2[%c0_14, %c8] : memref<8x72xf32, #tpu.memory_space<vmem>>, vector<8x1xf32>
    %63 = vector.extract_strided_slice %61 {offsets = [0, 0], sizes = [1, 256], strides = [1, 1]} : vector<8x256xf32> to vector<1x256xf32>
    %64 = vector.broadcast %62 : vector<8x1xf32> to vector<8x256xf32>
    %65 = vector.broadcast %63 : vector<1x256xf32> to vector<8x256xf32>
    %66 = arith.mulf %64, %65 : vector<8x256xf32>
    %67 = arith.addf %55, %66 : vector<8x256xf32>
    %c0_15 = arith.constant 0 : index
    %c9 = arith.constant 9 : index
    %68 = vector.load %arg2[%c0_15, %c9] : memref<8x72xf32, #tpu.memory_space<vmem>>, vector<8x1xf32>
    %69 = vector.extract_strided_slice %61 {offsets = [1, 0], sizes = [1, 256], strides = [1, 1]} : vector<8x256xf32> to vector<1x256xf32>
    %70 = vector.broadcast %68 : vector<8x1xf32> to vector<8x256xf32>
    %71 = vector.broadcast %69 : vector<1x256xf32> to vector<8x256xf32>
    %72 = arith.mulf %70, %71 : vector<8x256xf32>
    %73 = arith.addf %67, %72 : vector<8x256xf32>
    %c0_16 = arith.constant 0 : index
    %c10 = arith.constant 10 : index
    %74 = vector.load %arg2[%c0_16, %c10] : memref<8x72xf32, #tpu.memory_space<vmem>>, vector<8x1xf32>
    %75 = vector.extract_strided_slice %61 {offsets = [2, 0], sizes = [1, 256], strides = [1, 1]} : vector<8x256xf32> to vector<1x256xf32>
    %76 = vector.broadcast %74 : vector<8x1xf32> to vector<8x256xf32>
    %77 = vector.broadcast %75 : vector<1x256xf32> to vector<8x256xf32>
    %78 = arith.mulf %76, %77 : vector<8x256xf32>
    %79 = arith.addf %73, %78 : vector<8x256xf32>
    %c0_17 = arith.constant 0 : index
    %c11 = arith.constant 11 : index
    %80 = vector.load %arg2[%c0_17, %c11] : memref<8x72xf32, #tpu.memory_space<vmem>>, vector<8x1xf32>
    %81 = vector.extract_strided_slice %61 {offsets = [3, 0], sizes = [1, 256], strides = [1, 1]} : vector<8x256xf32> to vector<1x256xf32>
    %82 = vector.broadcast %80 : vector<8x1xf32> to vector<8x256xf32>
    %83 = vector.broadcast %81 : vector<1x256xf32> to vector<8x256xf32>
    %84 = arith.mulf %82, %83 : vector<8x256xf32>
    %85 = arith.addf %79, %84 : vector<8x256xf32>
    %c0_18 = arith.constant 0 : index
    %c12 = arith.constant 12 : index
    %86 = vector.load %arg2[%c0_18, %c12] : memref<8x72xf32, #tpu.memory_space<vmem>>, vector<8x1xf32>
    %87 = vector.extract_strided_slice %61 {offsets = [4, 0], sizes = [1, 256], strides = [1, 1]} : vector<8x256xf32> to vector<1x256xf32>
    %88 = vector.broadcast %86 : vector<8x1xf32> to vector<8x256xf32>
    %89 = vector.broadcast %87 : vector<1x256xf32> to vector<8x256xf32>
    %90 = arith.mulf %88, %89 : vector<8x256xf32>
    %91 = arith.addf %85, %90 : vector<8x256xf32>
    %c0_19 = arith.constant 0 : index
    %c13 = arith.constant 13 : index
    %92 = vector.load %arg2[%c0_19, %c13] : memref<8x72xf32, #tpu.memory_space<vmem>>, vector<8x1xf32>
    %93 = vector.extract_strided_slice %61 {offsets = [5, 0], sizes = [1, 256], strides = [1, 1]} : vector<8x256xf32> to vector<1x256xf32>
    %94 = vector.broadcast %92 : vector<8x1xf32> to vector<8x256xf32>
    %95 = vector.broadcast %93 : vector<1x256xf32> to vector<8x256xf32>
    %96 = arith.mulf %94, %95 : vector<8x256xf32>
    %97 = arith.addf %91, %96 : vector<8x256xf32>
    %c0_20 = arith.constant 0 : index
    %c14 = arith.constant 14 : index
    %98 = vector.load %arg2[%c0_20, %c14] : memref<8x72xf32, #tpu.memory_space<vmem>>, vector<8x1xf32>
    %99 = vector.extract_strided_slice %61 {offsets = [6, 0], sizes = [1, 256], strides = [1, 1]} : vector<8x256xf32> to vector<1x256xf32>
    %100 = vector.broadcast %98 : vector<8x1xf32> to vector<8x256xf32>
    %101 = vector.broadcast %99 : vector<1x256xf32> to vector<8x256xf32>
    %102 = arith.mulf %100, %101 : vector<8x256xf32>
    %103 = arith.addf %97, %102 : vector<8x256xf32>
    %c0_21 = arith.constant 0 : index
    %c15 = arith.constant 15 : index
    %104 = vector.load %arg2[%c0_21, %c15] : memref<8x72xf32, #tpu.memory_space<vmem>>, vector<8x1xf32>
    %105 = vector.extract_strided_slice %61 {offsets = [7, 0], sizes = [1, 256], strides = [1, 1]} : vector<8x256xf32> to vector<1x256xf32>
    %106 = vector.broadcast %104 : vector<8x1xf32> to vector<8x256xf32>
    %107 = vector.broadcast %105 : vector<1x256xf32> to vector<8x256xf32>
    %108 = arith.mulf %106, %107 : vector<8x256xf32>
    %109 = arith.addf %103, %108 : vector<8x256xf32>
    %110 = vector.extract_strided_slice %0 {offsets = [0, 241], sizes = [8, 15], strides = [1, 1]} : vector<8x256xf32> to vector<8x15xf32>
    %111 = vector.extract_strided_slice %0 {offsets = [0, 0], sizes = [8, 241], strides = [1, 1]} : vector<8x256xf32> to vector<8x241xf32>
    %112 = tpu.concatenate %110, %111 in 1 : vector<8x15xf32>, vector<8x241xf32> -> vector<8x256xf32>
    %c2_22 = arith.constant 2 : index
    %c0_23 = arith.constant 0 : index
    %113 = vector.load %arg4[%c2_22, %c0_23] : memref<9x256xf32, #tpu.memory_space<vmem>>, vector<1x256xf32>
    %114 = vector.broadcast %113 : vector<1x256xf32> to vector<8x256xf32>
    %115 = arith.mulf %112, %114 : vector<8x256xf32>
    %c0_24 = arith.constant 0 : index
    %c16 = arith.constant 16 : index
    %116 = vector.load %arg2[%c0_24, %c16] : memref<8x72xf32, #tpu.memory_space<vmem>>, vector<8x1xf32>
    %117 = vector.extract_strided_slice %115 {offsets = [0, 0], sizes = [1, 256], strides = [1, 1]} : vector<8x256xf32> to vector<1x256xf32>
    %118 = vector.broadcast %116 : vector<8x1xf32> to vector<8x256xf32>
    %119 = vector.broadcast %117 : vector<1x256xf32> to vector<8x256xf32>
    %120 = arith.mulf %118, %119 : vector<8x256xf32>
    %121 = arith.addf %109, %120 : vector<8x256xf32>
    %c0_25 = arith.constant 0 : index
    %c17 = arith.constant 17 : index
    %122 = vector.load %arg2[%c0_25, %c17] : memref<8x72xf32, #tpu.memory_space<vmem>>, vector<8x1xf32>
    %123 = vector.extract_strided_slice %115 {offsets = [1, 0], sizes = [1, 256], strides = [1, 1]} : vector<8x256xf32> to vector<1x256xf32>
    %124 = vector.broadcast %122 : vector<8x1xf32> to vector<8x256xf32>
    %125 = vector.broadcast %123 : vector<1x256xf32> to vector<8x256xf32>
    %126 = arith.mulf %124, %125 : vector<8x256xf32>
    %127 = arith.addf %121, %126 : vector<8x256xf32>
    %c0_26 = arith.constant 0 : index
    %c18 = arith.constant 18 : index
    %128 = vector.load %arg2[%c0_26, %c18] : memref<8x72xf32, #tpu.memory_space<vmem>>, vector<8x1xf32>
    %129 = vector.extract_strided_slice %115 {offsets = [2, 0], sizes = [1, 256], strides = [1, 1]} : vector<8x256xf32> to vector<1x256xf32>
    %130 = vector.broadcast %128 : vector<8x1xf32> to vector<8x256xf32>
    %131 = vector.broadcast %129 : vector<1x256xf32> to vector<8x256xf32>
    %132 = arith.mulf %130, %131 : vector<8x256xf32>
    %133 = arith.addf %127, %132 : vector<8x256xf32>
    %c0_27 = arith.constant 0 : index
    %c19 = arith.constant 19 : index
    %134 = vector.load %arg2[%c0_27, %c19] : memref<8x72xf32, #tpu.memory_space<vmem>>, vector<8x1xf32>
    %135 = vector.extract_strided_slice %115 {offsets = [3, 0], sizes = [1, 256], strides = [1, 1]} : vector<8x256xf32> to vector<1x256xf32>
    %136 = vector.broadcast %134 : vector<8x1xf32> to vector<8x256xf32>
    %137 = vector.broadcast %135 : vector<1x256xf32> to vector<8x256xf32>
    %138 = arith.mulf %136, %137 : vector<8x256xf32>
    %139 = arith.addf %133, %138 : vector<8x256xf32>
    %c0_28 = arith.constant 0 : index
    %c20 = arith.constant 20 : index
    %140 = vector.load %arg2[%c0_28, %c20] : memref<8x72xf32, #tpu.memory_space<vmem>>, vector<8x1xf32>
    %141 = vector.extract_strided_slice %115 {offsets = [4, 0], sizes = [1, 256], strides = [1, 1]} : vector<8x256xf32> to vector<1x256xf32>
    %142 = vector.broadcast %140 : vector<8x1xf32> to vector<8x256xf32>
    %143 = vector.broadcast %141 : vector<1x256xf32> to vector<8x256xf32>
    %144 = arith.mulf %142, %143 : vector<8x256xf32>
    %145 = arith.addf %139, %144 : vector<8x256xf32>
    %c0_29 = arith.constant 0 : index
    %c21 = arith.constant 21 : index
    %146 = vector.load %arg2[%c0_29, %c21] : memref<8x72xf32, #tpu.memory_space<vmem>>, vector<8x1xf32>
    %147 = vector.extract_strided_slice %115 {offsets = [5, 0], sizes = [1, 256], strides = [1, 1]} : vector<8x256xf32> to vector<1x256xf32>
    %148 = vector.broadcast %146 : vector<8x1xf32> to vector<8x256xf32>
    %149 = vector.broadcast %147 : vector<1x256xf32> to vector<8x256xf32>
    %150 = arith.mulf %148, %149 : vector<8x256xf32>
    %151 = arith.addf %145, %150 : vector<8x256xf32>
    %c0_30 = arith.constant 0 : index
    %c22 = arith.constant 22 : index
    %152 = vector.load %arg2[%c0_30, %c22] : memref<8x72xf32, #tpu.memory_space<vmem>>, vector<8x1xf32>
    %153 = vector.extract_strided_slice %115 {offsets = [6, 0], sizes = [1, 256], strides = [1, 1]} : vector<8x256xf32> to vector<1x256xf32>
    %154 = vector.broadcast %152 : vector<8x1xf32> to vector<8x256xf32>
    %155 = vector.broadcast %153 : vector<1x256xf32> to vector<8x256xf32>
    %156 = arith.mulf %154, %155 : vector<8x256xf32>
    %157 = arith.addf %151, %156 : vector<8x256xf32>
    %c0_31 = arith.constant 0 : index
    %c23 = arith.constant 23 : index
    %158 = vector.load %arg2[%c0_31, %c23] : memref<8x72xf32, #tpu.memory_space<vmem>>, vector<8x1xf32>
    %159 = vector.extract_strided_slice %115 {offsets = [7, 0], sizes = [1, 256], strides = [1, 1]} : vector<8x256xf32> to vector<1x256xf32>
    %160 = vector.broadcast %158 : vector<8x1xf32> to vector<8x256xf32>
    %161 = vector.broadcast %159 : vector<1x256xf32> to vector<8x256xf32>
    %162 = arith.mulf %160, %161 : vector<8x256xf32>
    %163 = arith.addf %157, %162 : vector<8x256xf32>
    %164 = vector.extract_strided_slice %0 {offsets = [0, 255], sizes = [8, 1], strides = [1, 1]} : vector<8x256xf32> to vector<8x1xf32>
    %165 = vector.extract_strided_slice %0 {offsets = [0, 0], sizes = [8, 255], strides = [1, 1]} : vector<8x256xf32> to vector<8x255xf32>
    %166 = tpu.concatenate %164, %165 in 1 : vector<8x1xf32>, vector<8x255xf32> -> vector<8x256xf32>
    %c3_32 = arith.constant 3 : index
    %c0_33 = arith.constant 0 : index
    %167 = vector.load %arg4[%c3_32, %c0_33] : memref<9x256xf32, #tpu.memory_space<vmem>>, vector<1x256xf32>
    %168 = vector.broadcast %167 : vector<1x256xf32> to vector<8x256xf32>
    %169 = arith.mulf %166, %168 : vector<8x256xf32>
    %c0_34 = arith.constant 0 : index
    %c24 = arith.constant 24 : index
    %170 = vector.load %arg2[%c0_34, %c24] : memref<8x72xf32, #tpu.memory_space<vmem>>, vector<8x1xf32>
    %171 = vector.extract_strided_slice %169 {offsets = [0, 0], sizes = [1, 256], strides = [1, 1]} : vector<8x256xf32> to vector<1x256xf32>
    %172 = vector.broadcast %170 : vector<8x1xf32> to vector<8x256xf32>
    %173 = vector.broadcast %171 : vector<1x256xf32> to vector<8x256xf32>
    %174 = arith.mulf %172, %173 : vector<8x256xf32>
    %175 = arith.addf %163, %174 : vector<8x256xf32>
    %c0_35 = arith.constant 0 : index
    %c25 = arith.constant 25 : index
    %176 = vector.load %arg2[%c0_35, %c25] : memref<8x72xf32, #tpu.memory_space<vmem>>, vector<8x1xf32>
    %177 = vector.extract_strided_slice %169 {offsets = [1, 0], sizes = [1, 256], strides = [1, 1]} : vector<8x256xf32> to vector<1x256xf32>
    %178 = vector.broadcast %176 : vector<8x1xf32> to vector<8x256xf32>
    %179 = vector.broadcast %177 : vector<1x256xf32> to vector<8x256xf32>
    %180 = arith.mulf %178, %179 : vector<8x256xf32>
    %181 = arith.addf %175, %180 : vector<8x256xf32>
    %c0_36 = arith.constant 0 : index
    %c26 = arith.constant 26 : index
    %182 = vector.load %arg2[%c0_36, %c26] : memref<8x72xf32, #tpu.memory_space<vmem>>, vector<8x1xf32>
    %183 = vector.extract_strided_slice %169 {offsets = [2, 0], sizes = [1, 256], strides = [1, 1]} : vector<8x256xf32> to vector<1x256xf32>
    %184 = vector.broadcast %182 : vector<8x1xf32> to vector<8x256xf32>
    %185 = vector.broadcast %183 : vector<1x256xf32> to vector<8x256xf32>
    %186 = arith.mulf %184, %185 : vector<8x256xf32>
    %187 = arith.addf %181, %186 : vector<8x256xf32>
    %c0_37 = arith.constant 0 : index
    %c27 = arith.constant 27 : index
    %188 = vector.load %arg2[%c0_37, %c27] : memref<8x72xf32, #tpu.memory_space<vmem>>, vector<8x1xf32>
    %189 = vector.extract_strided_slice %169 {offsets = [3, 0], sizes = [1, 256], strides = [1, 1]} : vector<8x256xf32> to vector<1x256xf32>
    %190 = vector.broadcast %188 : vector<8x1xf32> to vector<8x256xf32>
    %191 = vector.broadcast %189 : vector<1x256xf32> to vector<8x256xf32>
    %192 = arith.mulf %190, %191 : vector<8x256xf32>
    %193 = arith.addf %187, %192 : vector<8x256xf32>
    %c0_38 = arith.constant 0 : index
    %c28 = arith.constant 28 : index
    %194 = vector.load %arg2[%c0_38, %c28] : memref<8x72xf32, #tpu.memory_space<vmem>>, vector<8x1xf32>
    %195 = vector.extract_strided_slice %169 {offsets = [4, 0], sizes = [1, 256], strides = [1, 1]} : vector<8x256xf32> to vector<1x256xf32>
    %196 = vector.broadcast %194 : vector<8x1xf32> to vector<8x256xf32>
    %197 = vector.broadcast %195 : vector<1x256xf32> to vector<8x256xf32>
    %198 = arith.mulf %196, %197 : vector<8x256xf32>
    %199 = arith.addf %193, %198 : vector<8x256xf32>
    %c0_39 = arith.constant 0 : index
    %c29 = arith.constant 29 : index
    %200 = vector.load %arg2[%c0_39, %c29] : memref<8x72xf32, #tpu.memory_space<vmem>>, vector<8x1xf32>
    %201 = vector.extract_strided_slice %169 {offsets = [5, 0], sizes = [1, 256], strides = [1, 1]} : vector<8x256xf32> to vector<1x256xf32>
    %202 = vector.broadcast %200 : vector<8x1xf32> to vector<8x256xf32>
    %203 = vector.broadcast %201 : vector<1x256xf32> to vector<8x256xf32>
    %204 = arith.mulf %202, %203 : vector<8x256xf32>
    %205 = arith.addf %199, %204 : vector<8x256xf32>
    %c0_40 = arith.constant 0 : index
    %c30 = arith.constant 30 : index
    %206 = vector.load %arg2[%c0_40, %c30] : memref<8x72xf32, #tpu.memory_space<vmem>>, vector<8x1xf32>
    %207 = vector.extract_strided_slice %169 {offsets = [6, 0], sizes = [1, 256], strides = [1, 1]} : vector<8x256xf32> to vector<1x256xf32>
    %208 = vector.broadcast %206 : vector<8x1xf32> to vector<8x256xf32>
    %209 = vector.broadcast %207 : vector<1x256xf32> to vector<8x256xf32>
    %210 = arith.mulf %208, %209 : vector<8x256xf32>
    %211 = arith.addf %205, %210 : vector<8x256xf32>
    %c0_41 = arith.constant 0 : index
    %c31 = arith.constant 31 : index
    %212 = vector.load %arg2[%c0_41, %c31] : memref<8x72xf32, #tpu.memory_space<vmem>>, vector<8x1xf32>
    %213 = vector.extract_strided_slice %169 {offsets = [7, 0], sizes = [1, 256], strides = [1, 1]} : vector<8x256xf32> to vector<1x256xf32>
    %214 = vector.broadcast %212 : vector<8x1xf32> to vector<8x256xf32>
    %215 = vector.broadcast %213 : vector<1x256xf32> to vector<8x256xf32>
    %216 = arith.mulf %214, %215 : vector<8x256xf32>
    %217 = arith.addf %211, %216 : vector<8x256xf32>
    %c0_42 = arith.constant 0 : index
    %c32 = arith.constant 32 : index
    %218 = vector.load %arg2[%c0_42, %c32] : memref<8x72xf32, #tpu.memory_space<vmem>>, vector<8x1xf32>
    %219 = vector.extract_strided_slice %0 {offsets = [0, 0], sizes = [1, 256], strides = [1, 1]} : vector<8x256xf32> to vector<1x256xf32>
    %220 = vector.broadcast %218 : vector<8x1xf32> to vector<8x256xf32>
    %221 = vector.broadcast %219 : vector<1x256xf32> to vector<8x256xf32>
    %222 = arith.mulf %220, %221 : vector<8x256xf32>
    %223 = arith.addf %217, %222 : vector<8x256xf32>
    %c0_43 = arith.constant 0 : index
    %c33 = arith.constant 33 : index
    %224 = vector.load %arg2[%c0_43, %c33] : memref<8x72xf32, #tpu.memory_space<vmem>>, vector<8x1xf32>
    %225 = vector.extract_strided_slice %0 {offsets = [1, 0], sizes = [1, 256], strides = [1, 1]} : vector<8x256xf32> to vector<1x256xf32>
    %226 = vector.broadcast %224 : vector<8x1xf32> to vector<8x256xf32>
    %227 = vector.broadcast %225 : vector<1x256xf32> to vector<8x256xf32>
    %228 = arith.mulf %226, %227 : vector<8x256xf32>
    %229 = arith.addf %223, %228 : vector<8x256xf32>
    %c0_44 = arith.constant 0 : index
    %c34 = arith.constant 34 : index
    %230 = vector.load %arg2[%c0_44, %c34] : memref<8x72xf32, #tpu.memory_space<vmem>>, vector<8x1xf32>
    %231 = vector.extract_strided_slice %0 {offsets = [2, 0], sizes = [1, 256], strides = [1, 1]} : vector<8x256xf32> to vector<1x256xf32>
    %232 = vector.broadcast %230 : vector<8x1xf32> to vector<8x256xf32>
    %233 = vector.broadcast %231 : vector<1x256xf32> to vector<8x256xf32>
    %234 = arith.mulf %232, %233 : vector<8x256xf32>
    %235 = arith.addf %229, %234 : vector<8x256xf32>
    %c0_45 = arith.constant 0 : index
    %c35 = arith.constant 35 : index
    %236 = vector.load %arg2[%c0_45, %c35] : memref<8x72xf32, #tpu.memory_space<vmem>>, vector<8x1xf32>
    %237 = vector.extract_strided_slice %0 {offsets = [3, 0], sizes = [1, 256], strides = [1, 1]} : vector<8x256xf32> to vector<1x256xf32>
    %238 = vector.broadcast %236 : vector<8x1xf32> to vector<8x256xf32>
    %239 = vector.broadcast %237 : vector<1x256xf32> to vector<8x256xf32>
    %240 = arith.mulf %238, %239 : vector<8x256xf32>
    %241 = arith.addf %235, %240 : vector<8x256xf32>
    %c0_46 = arith.constant 0 : index
    %c36 = arith.constant 36 : index
    %242 = vector.load %arg2[%c0_46, %c36] : memref<8x72xf32, #tpu.memory_space<vmem>>, vector<8x1xf32>
    %243 = vector.extract_strided_slice %0 {offsets = [4, 0], sizes = [1, 256], strides = [1, 1]} : vector<8x256xf32> to vector<1x256xf32>
    %244 = vector.broadcast %242 : vector<8x1xf32> to vector<8x256xf32>
    %245 = vector.broadcast %243 : vector<1x256xf32> to vector<8x256xf32>
    %246 = arith.mulf %244, %245 : vector<8x256xf32>
    %247 = arith.addf %241, %246 : vector<8x256xf32>
    %c0_47 = arith.constant 0 : index
    %c37 = arith.constant 37 : index
    %248 = vector.load %arg2[%c0_47, %c37] : memref<8x72xf32, #tpu.memory_space<vmem>>, vector<8x1xf32>
    %249 = vector.extract_strided_slice %0 {offsets = [5, 0], sizes = [1, 256], strides = [1, 1]} : vector<8x256xf32> to vector<1x256xf32>
    %250 = vector.broadcast %248 : vector<8x1xf32> to vector<8x256xf32>
    %251 = vector.broadcast %249 : vector<1x256xf32> to vector<8x256xf32>
    %252 = arith.mulf %250, %251 : vector<8x256xf32>
    %253 = arith.addf %247, %252 : vector<8x256xf32>
    %c0_48 = arith.constant 0 : index
    %c38 = arith.constant 38 : index
    %254 = vector.load %arg2[%c0_48, %c38] : memref<8x72xf32, #tpu.memory_space<vmem>>, vector<8x1xf32>
    %255 = vector.extract_strided_slice %0 {offsets = [6, 0], sizes = [1, 256], strides = [1, 1]} : vector<8x256xf32> to vector<1x256xf32>
    %256 = vector.broadcast %254 : vector<8x1xf32> to vector<8x256xf32>
    %257 = vector.broadcast %255 : vector<1x256xf32> to vector<8x256xf32>
    %258 = arith.mulf %256, %257 : vector<8x256xf32>
    %259 = arith.addf %253, %258 : vector<8x256xf32>
    %c0_49 = arith.constant 0 : index
    %c39 = arith.constant 39 : index
    %260 = vector.load %arg2[%c0_49, %c39] : memref<8x72xf32, #tpu.memory_space<vmem>>, vector<8x1xf32>
    %261 = vector.extract_strided_slice %0 {offsets = [7, 0], sizes = [1, 256], strides = [1, 1]} : vector<8x256xf32> to vector<1x256xf32>
    %262 = vector.broadcast %260 : vector<8x1xf32> to vector<8x256xf32>
    %263 = vector.broadcast %261 : vector<1x256xf32> to vector<8x256xf32>
    %264 = arith.mulf %262, %263 : vector<8x256xf32>
    %265 = arith.addf %259, %264 : vector<8x256xf32>
    %266 = vector.extract_strided_slice %0 {offsets = [0, 1], sizes = [8, 255], strides = [1, 1]} : vector<8x256xf32> to vector<8x255xf32>
    %267 = vector.extract_strided_slice %0 {offsets = [0, 0], sizes = [8, 1], strides = [1, 1]} : vector<8x256xf32> to vector<8x1xf32>
    %268 = tpu.concatenate %266, %267 in 1 : vector<8x255xf32>, vector<8x1xf32> -> vector<8x256xf32>
    %c5_50 = arith.constant 5 : index
    %c0_51 = arith.constant 0 : index
    %269 = vector.load %arg4[%c5_50, %c0_51] : memref<9x256xf32, #tpu.memory_space<vmem>>, vector<1x256xf32>
    %270 = vector.broadcast %269 : vector<1x256xf32> to vector<8x256xf32>
    %271 = arith.mulf %268, %270 : vector<8x256xf32>
    %c0_52 = arith.constant 0 : index
    %c40 = arith.constant 40 : index
    %272 = vector.load %arg2[%c0_52, %c40] : memref<8x72xf32, #tpu.memory_space<vmem>>, vector<8x1xf32>
    %273 = vector.extract_strided_slice %271 {offsets = [0, 0], sizes = [1, 256], strides = [1, 1]} : vector<8x256xf32> to vector<1x256xf32>
    %274 = vector.broadcast %272 : vector<8x1xf32> to vector<8x256xf32>
    %275 = vector.broadcast %273 : vector<1x256xf32> to vector<8x256xf32>
    %276 = arith.mulf %274, %275 : vector<8x256xf32>
    %277 = arith.addf %265, %276 : vector<8x256xf32>
    %c0_53 = arith.constant 0 : index
    %c41 = arith.constant 41 : index
    %278 = vector.load %arg2[%c0_53, %c41] : memref<8x72xf32, #tpu.memory_space<vmem>>, vector<8x1xf32>
    %279 = vector.extract_strided_slice %271 {offsets = [1, 0], sizes = [1, 256], strides = [1, 1]} : vector<8x256xf32> to vector<1x256xf32>
    %280 = vector.broadcast %278 : vector<8x1xf32> to vector<8x256xf32>
    %281 = vector.broadcast %279 : vector<1x256xf32> to vector<8x256xf32>
    %282 = arith.mulf %280, %281 : vector<8x256xf32>
    %283 = arith.addf %277, %282 : vector<8x256xf32>
    %c0_54 = arith.constant 0 : index
    %c42 = arith.constant 42 : index
    %284 = vector.load %arg2[%c0_54, %c42] : memref<8x72xf32, #tpu.memory_space<vmem>>, vector<8x1xf32>
    %285 = vector.extract_strided_slice %271 {offsets = [2, 0], sizes = [1, 256], strides = [1, 1]} : vector<8x256xf32> to vector<1x256xf32>
    %286 = vector.broadcast %284 : vector<8x1xf32> to vector<8x256xf32>
    %287 = vector.broadcast %285 : vector<1x256xf32> to vector<8x256xf32>
    %288 = arith.mulf %286, %287 : vector<8x256xf32>
    %289 = arith.addf %283, %288 : vector<8x256xf32>
    %c0_55 = arith.constant 0 : index
    %c43 = arith.constant 43 : index
    %290 = vector.load %arg2[%c0_55, %c43] : memref<8x72xf32, #tpu.memory_space<vmem>>, vector<8x1xf32>
    %291 = vector.extract_strided_slice %271 {offsets = [3, 0], sizes = [1, 256], strides = [1, 1]} : vector<8x256xf32> to vector<1x256xf32>
    %292 = vector.broadcast %290 : vector<8x1xf32> to vector<8x256xf32>
    %293 = vector.broadcast %291 : vector<1x256xf32> to vector<8x256xf32>
    %294 = arith.mulf %292, %293 : vector<8x256xf32>
    %295 = arith.addf %289, %294 : vector<8x256xf32>
    %c0_56 = arith.constant 0 : index
    %c44 = arith.constant 44 : index
    %296 = vector.load %arg2[%c0_56, %c44] : memref<8x72xf32, #tpu.memory_space<vmem>>, vector<8x1xf32>
    %297 = vector.extract_strided_slice %271 {offsets = [4, 0], sizes = [1, 256], strides = [1, 1]} : vector<8x256xf32> to vector<1x256xf32>
    %298 = vector.broadcast %296 : vector<8x1xf32> to vector<8x256xf32>
    %299 = vector.broadcast %297 : vector<1x256xf32> to vector<8x256xf32>
    %300 = arith.mulf %298, %299 : vector<8x256xf32>
    %301 = arith.addf %295, %300 : vector<8x256xf32>
    %c0_57 = arith.constant 0 : index
    %c45 = arith.constant 45 : index
    %302 = vector.load %arg2[%c0_57, %c45] : memref<8x72xf32, #tpu.memory_space<vmem>>, vector<8x1xf32>
    %303 = vector.extract_strided_slice %271 {offsets = [5, 0], sizes = [1, 256], strides = [1, 1]} : vector<8x256xf32> to vector<1x256xf32>
    %304 = vector.broadcast %302 : vector<8x1xf32> to vector<8x256xf32>
    %305 = vector.broadcast %303 : vector<1x256xf32> to vector<8x256xf32>
    %306 = arith.mulf %304, %305 : vector<8x256xf32>
    %307 = arith.addf %301, %306 : vector<8x256xf32>
    %c0_58 = arith.constant 0 : index
    %c46 = arith.constant 46 : index
    %308 = vector.load %arg2[%c0_58, %c46] : memref<8x72xf32, #tpu.memory_space<vmem>>, vector<8x1xf32>
    %309 = vector.extract_strided_slice %271 {offsets = [6, 0], sizes = [1, 256], strides = [1, 1]} : vector<8x256xf32> to vector<1x256xf32>
    %310 = vector.broadcast %308 : vector<8x1xf32> to vector<8x256xf32>
    %311 = vector.broadcast %309 : vector<1x256xf32> to vector<8x256xf32>
    %312 = arith.mulf %310, %311 : vector<8x256xf32>
    %313 = arith.addf %307, %312 : vector<8x256xf32>
    %c0_59 = arith.constant 0 : index
    %c47 = arith.constant 47 : index
    %314 = vector.load %arg2[%c0_59, %c47] : memref<8x72xf32, #tpu.memory_space<vmem>>, vector<8x1xf32>
    %315 = vector.extract_strided_slice %271 {offsets = [7, 0], sizes = [1, 256], strides = [1, 1]} : vector<8x256xf32> to vector<1x256xf32>
    %316 = vector.broadcast %314 : vector<8x1xf32> to vector<8x256xf32>
    %317 = vector.broadcast %315 : vector<1x256xf32> to vector<8x256xf32>
    %318 = arith.mulf %316, %317 : vector<8x256xf32>
    %319 = arith.addf %313, %318 : vector<8x256xf32>
    %320 = vector.extract_strided_slice %0 {offsets = [0, 15], sizes = [8, 241], strides = [1, 1]} : vector<8x256xf32> to vector<8x241xf32>
    %321 = vector.extract_strided_slice %0 {offsets = [0, 0], sizes = [8, 15], strides = [1, 1]} : vector<8x256xf32> to vector<8x15xf32>
    %322 = tpu.concatenate %320, %321 in 1 : vector<8x241xf32>, vector<8x15xf32> -> vector<8x256xf32>
    %c6_60 = arith.constant 6 : index
    %c0_61 = arith.constant 0 : index
    %323 = vector.load %arg4[%c6_60, %c0_61] : memref<9x256xf32, #tpu.memory_space<vmem>>, vector<1x256xf32>
    %324 = vector.broadcast %323 : vector<1x256xf32> to vector<8x256xf32>
    %325 = arith.mulf %322, %324 : vector<8x256xf32>
    %c0_62 = arith.constant 0 : index
    %c48 = arith.constant 48 : index
    %326 = vector.load %arg2[%c0_62, %c48] : memref<8x72xf32, #tpu.memory_space<vmem>>, vector<8x1xf32>
    %327 = vector.extract_strided_slice %325 {offsets = [0, 0], sizes = [1, 256], strides = [1, 1]} : vector<8x256xf32> to vector<1x256xf32>
    %328 = vector.broadcast %326 : vector<8x1xf32> to vector<8x256xf32>
    %329 = vector.broadcast %327 : vector<1x256xf32> to vector<8x256xf32>
    %330 = arith.mulf %328, %329 : vector<8x256xf32>
    %331 = arith.addf %319, %330 : vector<8x256xf32>
    %c0_63 = arith.constant 0 : index
    %c49 = arith.constant 49 : index
    %332 = vector.load %arg2[%c0_63, %c49] : memref<8x72xf32, #tpu.memory_space<vmem>>, vector<8x1xf32>
    %333 = vector.extract_strided_slice %325 {offsets = [1, 0], sizes = [1, 256], strides = [1, 1]} : vector<8x256xf32> to vector<1x256xf32>
    %334 = vector.broadcast %332 : vector<8x1xf32> to vector<8x256xf32>
    %335 = vector.broadcast %333 : vector<1x256xf32> to vector<8x256xf32>
    %336 = arith.mulf %334, %335 : vector<8x256xf32>
    %337 = arith.addf %331, %336 : vector<8x256xf32>
    %c0_64 = arith.constant 0 : index
    %c50 = arith.constant 50 : index
    %338 = vector.load %arg2[%c0_64, %c50] : memref<8x72xf32, #tpu.memory_space<vmem>>, vector<8x1xf32>
    %339 = vector.extract_strided_slice %325 {offsets = [2, 0], sizes = [1, 256], strides = [1, 1]} : vector<8x256xf32> to vector<1x256xf32>
    %340 = vector.broadcast %338 : vector<8x1xf32> to vector<8x256xf32>
    %341 = vector.broadcast %339 : vector<1x256xf32> to vector<8x256xf32>
    %342 = arith.mulf %340, %341 : vector<8x256xf32>
    %343 = arith.addf %337, %342 : vector<8x256xf32>
    %c0_65 = arith.constant 0 : index
    %c51 = arith.constant 51 : index
    %344 = vector.load %arg2[%c0_65, %c51] : memref<8x72xf32, #tpu.memory_space<vmem>>, vector<8x1xf32>
    %345 = vector.extract_strided_slice %325 {offsets = [3, 0], sizes = [1, 256], strides = [1, 1]} : vector<8x256xf32> to vector<1x256xf32>
    %346 = vector.broadcast %344 : vector<8x1xf32> to vector<8x256xf32>
    %347 = vector.broadcast %345 : vector<1x256xf32> to vector<8x256xf32>
    %348 = arith.mulf %346, %347 : vector<8x256xf32>
    %349 = arith.addf %343, %348 : vector<8x256xf32>
    %c0_66 = arith.constant 0 : index
    %c52 = arith.constant 52 : index
    %350 = vector.load %arg2[%c0_66, %c52] : memref<8x72xf32, #tpu.memory_space<vmem>>, vector<8x1xf32>
    %351 = vector.extract_strided_slice %325 {offsets = [4, 0], sizes = [1, 256], strides = [1, 1]} : vector<8x256xf32> to vector<1x256xf32>
    %352 = vector.broadcast %350 : vector<8x1xf32> to vector<8x256xf32>
    %353 = vector.broadcast %351 : vector<1x256xf32> to vector<8x256xf32>
    %354 = arith.mulf %352, %353 : vector<8x256xf32>
    %355 = arith.addf %349, %354 : vector<8x256xf32>
    %c0_67 = arith.constant 0 : index
    %c53 = arith.constant 53 : index
    %356 = vector.load %arg2[%c0_67, %c53] : memref<8x72xf32, #tpu.memory_space<vmem>>, vector<8x1xf32>
    %357 = vector.extract_strided_slice %325 {offsets = [5, 0], sizes = [1, 256], strides = [1, 1]} : vector<8x256xf32> to vector<1x256xf32>
    %358 = vector.broadcast %356 : vector<8x1xf32> to vector<8x256xf32>
    %359 = vector.broadcast %357 : vector<1x256xf32> to vector<8x256xf32>
    %360 = arith.mulf %358, %359 : vector<8x256xf32>
    %361 = arith.addf %355, %360 : vector<8x256xf32>
    %c0_68 = arith.constant 0 : index
    %c54 = arith.constant 54 : index
    %362 = vector.load %arg2[%c0_68, %c54] : memref<8x72xf32, #tpu.memory_space<vmem>>, vector<8x1xf32>
    %363 = vector.extract_strided_slice %325 {offsets = [6, 0], sizes = [1, 256], strides = [1, 1]} : vector<8x256xf32> to vector<1x256xf32>
    %364 = vector.broadcast %362 : vector<8x1xf32> to vector<8x256xf32>
    %365 = vector.broadcast %363 : vector<1x256xf32> to vector<8x256xf32>
    %366 = arith.mulf %364, %365 : vector<8x256xf32>
    %367 = arith.addf %361, %366 : vector<8x256xf32>
    %c0_69 = arith.constant 0 : index
    %c55 = arith.constant 55 : index
    %368 = vector.load %arg2[%c0_69, %c55] : memref<8x72xf32, #tpu.memory_space<vmem>>, vector<8x1xf32>
    %369 = vector.extract_strided_slice %325 {offsets = [7, 0], sizes = [1, 256], strides = [1, 1]} : vector<8x256xf32> to vector<1x256xf32>
    %370 = vector.broadcast %368 : vector<8x1xf32> to vector<8x256xf32>
    %371 = vector.broadcast %369 : vector<1x256xf32> to vector<8x256xf32>
    %372 = arith.mulf %370, %371 : vector<8x256xf32>
    %373 = arith.addf %367, %372 : vector<8x256xf32>
    %374 = vector.extract_strided_slice %0 {offsets = [0, 16], sizes = [8, 240], strides = [1, 1]} : vector<8x256xf32> to vector<8x240xf32>
    %375 = vector.extract_strided_slice %0 {offsets = [0, 0], sizes = [8, 16], strides = [1, 1]} : vector<8x256xf32> to vector<8x16xf32>
    %376 = tpu.concatenate %374, %375 in 1 : vector<8x240xf32>, vector<8x16xf32> -> vector<8x256xf32>
    %c7_70 = arith.constant 7 : index
    %c0_71 = arith.constant 0 : index
    %377 = vector.load %arg4[%c7_70, %c0_71] : memref<9x256xf32, #tpu.memory_space<vmem>>, vector<1x256xf32>
    %378 = vector.broadcast %377 : vector<1x256xf32> to vector<8x256xf32>
    %379 = arith.mulf %376, %378 : vector<8x256xf32>
    %c0_72 = arith.constant 0 : index
    %c56 = arith.constant 56 : index
    %380 = vector.load %arg2[%c0_72, %c56] : memref<8x72xf32, #tpu.memory_space<vmem>>, vector<8x1xf32>
    %381 = vector.extract_strided_slice %379 {offsets = [0, 0], sizes = [1, 256], strides = [1, 1]} : vector<8x256xf32> to vector<1x256xf32>
    %382 = vector.broadcast %380 : vector<8x1xf32> to vector<8x256xf32>
    %383 = vector.broadcast %381 : vector<1x256xf32> to vector<8x256xf32>
    %384 = arith.mulf %382, %383 : vector<8x256xf32>
    %385 = arith.addf %373, %384 : vector<8x256xf32>
    %c0_73 = arith.constant 0 : index
    %c57 = arith.constant 57 : index
    %386 = vector.load %arg2[%c0_73, %c57] : memref<8x72xf32, #tpu.memory_space<vmem>>, vector<8x1xf32>
    %387 = vector.extract_strided_slice %379 {offsets = [1, 0], sizes = [1, 256], strides = [1, 1]} : vector<8x256xf32> to vector<1x256xf32>
    %388 = vector.broadcast %386 : vector<8x1xf32> to vector<8x256xf32>
    %389 = vector.broadcast %387 : vector<1x256xf32> to vector<8x256xf32>
    %390 = arith.mulf %388, %389 : vector<8x256xf32>
    %391 = arith.addf %385, %390 : vector<8x256xf32>
    %c0_74 = arith.constant 0 : index
    %c58 = arith.constant 58 : index
    %392 = vector.load %arg2[%c0_74, %c58] : memref<8x72xf32, #tpu.memory_space<vmem>>, vector<8x1xf32>
    %393 = vector.extract_strided_slice %379 {offsets = [2, 0], sizes = [1, 256], strides = [1, 1]} : vector<8x256xf32> to vector<1x256xf32>
    %394 = vector.broadcast %392 : vector<8x1xf32> to vector<8x256xf32>
    %395 = vector.broadcast %393 : vector<1x256xf32> to vector<8x256xf32>
    %396 = arith.mulf %394, %395 : vector<8x256xf32>
    %397 = arith.addf %391, %396 : vector<8x256xf32>
    %c0_75 = arith.constant 0 : index
    %c59 = arith.constant 59 : index
    %398 = vector.load %arg2[%c0_75, %c59] : memref<8x72xf32, #tpu.memory_space<vmem>>, vector<8x1xf32>
    %399 = vector.extract_strided_slice %379 {offsets = [3, 0], sizes = [1, 256], strides = [1, 1]} : vector<8x256xf32> to vector<1x256xf32>
    %400 = vector.broadcast %398 : vector<8x1xf32> to vector<8x256xf32>
    %401 = vector.broadcast %399 : vector<1x256xf32> to vector<8x256xf32>
    %402 = arith.mulf %400, %401 : vector<8x256xf32>
    %403 = arith.addf %397, %402 : vector<8x256xf32>
    %c0_76 = arith.constant 0 : index
    %c60 = arith.constant 60 : index
    %404 = vector.load %arg2[%c0_76, %c60] : memref<8x72xf32, #tpu.memory_space<vmem>>, vector<8x1xf32>
    %405 = vector.extract_strided_slice %379 {offsets = [4, 0], sizes = [1, 256], strides = [1, 1]} : vector<8x256xf32> to vector<1x256xf32>
    %406 = vector.broadcast %404 : vector<8x1xf32> to vector<8x256xf32>
    %407 = vector.broadcast %405 : vector<1x256xf32> to vector<8x256xf32>
    %408 = arith.mulf %406, %407 : vector<8x256xf32>
    %409 = arith.addf %403, %408 : vector<8x256xf32>
    %c0_77 = arith.constant 0 : index
    %c61 = arith.constant 61 : index
    %410 = vector.load %arg2[%c0_77, %c61] : memref<8x72xf32, #tpu.memory_space<vmem>>, vector<8x1xf32>
    %411 = vector.extract_strided_slice %379 {offsets = [5, 0], sizes = [1, 256], strides = [1, 1]} : vector<8x256xf32> to vector<1x256xf32>
    %412 = vector.broadcast %410 : vector<8x1xf32> to vector<8x256xf32>
    %413 = vector.broadcast %411 : vector<1x256xf32> to vector<8x256xf32>
    %414 = arith.mulf %412, %413 : vector<8x256xf32>
    %415 = arith.addf %409, %414 : vector<8x256xf32>
    %c0_78 = arith.constant 0 : index
    %c62 = arith.constant 62 : index
    %416 = vector.load %arg2[%c0_78, %c62] : memref<8x72xf32, #tpu.memory_space<vmem>>, vector<8x1xf32>
    %417 = vector.extract_strided_slice %379 {offsets = [6, 0], sizes = [1, 256], strides = [1, 1]} : vector<8x256xf32> to vector<1x256xf32>
    %418 = vector.broadcast %416 : vector<8x1xf32> to vector<8x256xf32>
    %419 = vector.broadcast %417 : vector<1x256xf32> to vector<8x256xf32>
    %420 = arith.mulf %418, %419 : vector<8x256xf32>
    %421 = arith.addf %415, %420 : vector<8x256xf32>
    %c0_79 = arith.constant 0 : index
    %c63 = arith.constant 63 : index
    %422 = vector.load %arg2[%c0_79, %c63] : memref<8x72xf32, #tpu.memory_space<vmem>>, vector<8x1xf32>
    %423 = vector.extract_strided_slice %379 {offsets = [7, 0], sizes = [1, 256], strides = [1, 1]} : vector<8x256xf32> to vector<1x256xf32>
    %424 = vector.broadcast %422 : vector<8x1xf32> to vector<8x256xf32>
    %425 = vector.broadcast %423 : vector<1x256xf32> to vector<8x256xf32>
    %426 = arith.mulf %424, %425 : vector<8x256xf32>
    %427 = arith.addf %421, %426 : vector<8x256xf32>
    %428 = vector.extract_strided_slice %0 {offsets = [0, 17], sizes = [8, 239], strides = [1, 1]} : vector<8x256xf32> to vector<8x239xf32>
    %429 = vector.extract_strided_slice %0 {offsets = [0, 0], sizes = [8, 17], strides = [1, 1]} : vector<8x256xf32> to vector<8x17xf32>
    %430 = tpu.concatenate %428, %429 in 1 : vector<8x239xf32>, vector<8x17xf32> -> vector<8x256xf32>
    %c8_80 = arith.constant 8 : index
    %c0_81 = arith.constant 0 : index
    %431 = vector.load %arg4[%c8_80, %c0_81] : memref<9x256xf32, #tpu.memory_space<vmem>>, vector<1x256xf32>
    %432 = vector.broadcast %431 : vector<1x256xf32> to vector<8x256xf32>
    %433 = arith.mulf %430, %432 : vector<8x256xf32>
    %c0_82 = arith.constant 0 : index
    %c64 = arith.constant 64 : index
    %434 = vector.load %arg2[%c0_82, %c64] : memref<8x72xf32, #tpu.memory_space<vmem>>, vector<8x1xf32>
    %435 = vector.extract_strided_slice %433 {offsets = [0, 0], sizes = [1, 256], strides = [1, 1]} : vector<8x256xf32> to vector<1x256xf32>
    %436 = vector.broadcast %434 : vector<8x1xf32> to vector<8x256xf32>
    %437 = vector.broadcast %435 : vector<1x256xf32> to vector<8x256xf32>
    %438 = arith.mulf %436, %437 : vector<8x256xf32>
    %439 = arith.addf %427, %438 : vector<8x256xf32>
    %c0_83 = arith.constant 0 : index
    %c65 = arith.constant 65 : index
    %440 = vector.load %arg2[%c0_83, %c65] : memref<8x72xf32, #tpu.memory_space<vmem>>, vector<8x1xf32>
    %441 = vector.extract_strided_slice %433 {offsets = [1, 0], sizes = [1, 256], strides = [1, 1]} : vector<8x256xf32> to vector<1x256xf32>
    %442 = vector.broadcast %440 : vector<8x1xf32> to vector<8x256xf32>
    %443 = vector.broadcast %441 : vector<1x256xf32> to vector<8x256xf32>
    %444 = arith.mulf %442, %443 : vector<8x256xf32>
    %445 = arith.addf %439, %444 : vector<8x256xf32>
    %c0_84 = arith.constant 0 : index
    %c66 = arith.constant 66 : index
    %446 = vector.load %arg2[%c0_84, %c66] : memref<8x72xf32, #tpu.memory_space<vmem>>, vector<8x1xf32>
    %447 = vector.extract_strided_slice %433 {offsets = [2, 0], sizes = [1, 256], strides = [1, 1]} : vector<8x256xf32> to vector<1x256xf32>
    %448 = vector.broadcast %446 : vector<8x1xf32> to vector<8x256xf32>
    %449 = vector.broadcast %447 : vector<1x256xf32> to vector<8x256xf32>
    %450 = arith.mulf %448, %449 : vector<8x256xf32>
    %451 = arith.addf %445, %450 : vector<8x256xf32>
    %c0_85 = arith.constant 0 : index
    %c67 = arith.constant 67 : index
    %452 = vector.load %arg2[%c0_85, %c67] : memref<8x72xf32, #tpu.memory_space<vmem>>, vector<8x1xf32>
    %453 = vector.extract_strided_slice %433 {offsets = [3, 0], sizes = [1, 256], strides = [1, 1]} : vector<8x256xf32> to vector<1x256xf32>
    %454 = vector.broadcast %452 : vector<8x1xf32> to vector<8x256xf32>
    %455 = vector.broadcast %453 : vector<1x256xf32> to vector<8x256xf32>
    %456 = arith.mulf %454, %455 : vector<8x256xf32>
    %457 = arith.addf %451, %456 : vector<8x256xf32>
    %c0_86 = arith.constant 0 : index
    %c68 = arith.constant 68 : index
    %458 = vector.load %arg2[%c0_86, %c68] : memref<8x72xf32, #tpu.memory_space<vmem>>, vector<8x1xf32>
    %459 = vector.extract_strided_slice %433 {offsets = [4, 0], sizes = [1, 256], strides = [1, 1]} : vector<8x256xf32> to vector<1x256xf32>
    %460 = vector.broadcast %458 : vector<8x1xf32> to vector<8x256xf32>
    %461 = vector.broadcast %459 : vector<1x256xf32> to vector<8x256xf32>
    %462 = arith.mulf %460, %461 : vector<8x256xf32>
    %463 = arith.addf %457, %462 : vector<8x256xf32>
    %c0_87 = arith.constant 0 : index
    %c69 = arith.constant 69 : index
    %464 = vector.load %arg2[%c0_87, %c69] : memref<8x72xf32, #tpu.memory_space<vmem>>, vector<8x1xf32>
    %465 = vector.extract_strided_slice %433 {offsets = [5, 0], sizes = [1, 256], strides = [1, 1]} : vector<8x256xf32> to vector<1x256xf32>
    %466 = vector.broadcast %464 : vector<8x1xf32> to vector<8x256xf32>
    %467 = vector.broadcast %465 : vector<1x256xf32> to vector<8x256xf32>
    %468 = arith.mulf %466, %467 : vector<8x256xf32>
    %469 = arith.addf %463, %468 : vector<8x256xf32>
    %c0_88 = arith.constant 0 : index
    %c70 = arith.constant 70 : index
    %470 = vector.load %arg2[%c0_88, %c70] : memref<8x72xf32, #tpu.memory_space<vmem>>, vector<8x1xf32>
    %471 = vector.extract_strided_slice %433 {offsets = [6, 0], sizes = [1, 256], strides = [1, 1]} : vector<8x256xf32> to vector<1x256xf32>
    %472 = vector.broadcast %470 : vector<8x1xf32> to vector<8x256xf32>
    %473 = vector.broadcast %471 : vector<1x256xf32> to vector<8x256xf32>
    %474 = arith.mulf %472, %473 : vector<8x256xf32>
    %475 = arith.addf %469, %474 : vector<8x256xf32>
    %c0_89 = arith.constant 0 : index
    %c71 = arith.constant 71 : index
    %476 = vector.load %arg2[%c0_89, %c71] : memref<8x72xf32, #tpu.memory_space<vmem>>, vector<8x1xf32>
    %477 = vector.extract_strided_slice %433 {offsets = [7, 0], sizes = [1, 256], strides = [1, 1]} : vector<8x256xf32> to vector<1x256xf32>
    %478 = vector.broadcast %476 : vector<8x1xf32> to vector<8x256xf32>
    %479 = vector.broadcast %477 : vector<1x256xf32> to vector<8x256xf32>
    %480 = arith.mulf %478, %479 : vector<8x256xf32>
    %481 = arith.addf %475, %480 : vector<8x256xf32>
    %c0_90 = arith.constant 0 : index
    %c0_91 = arith.constant 0 : index
    %482 = vector.load %arg3[%c0_90, %c0_91] : memref<8x1xf32, #tpu.memory_space<vmem>>, vector<8x1xf32>
    %483 = vector.broadcast %482 : vector<8x1xf32> to vector<8x256xf32>
    %484 = arith.addf %481, %483 : vector<8x256xf32>
    %cst_92 = arith.constant 0.000000e+00 : f32
    %485 = vector.broadcast %cst_92 : f32 to vector<8x256xf32>
    %486 = arith.maximumf %484, %485 : vector<8x256xf32>
    %c0_93 = arith.constant 0 : index
    %c0_94 = arith.constant 0 : index
    %487 = vector.load %arg5[%c0_93, %c0_94] : memref<8x256xf32, #tpu.memory_space<vmem>>, vector<8x256xf32>
    tpu.vector_store %arg5[%c0_93, %c0_94], %486 {strides = array<i32>} : memref<8x256xf32, #tpu.memory_space<vmem>>, vector<8x256xf32>,
    return
  }
  func.func @transform_0(%arg0: i32) -> (i32, i32) {
    %c0_i32 = arith.constant 0 : i32
    %c0_i32_0 = arith.constant 0 : i32
    %c0_i32_1 = arith.constant 0 : i32
    return %c0_i32, %c0_i32_0 : i32, i32
  }
  func.func @transform_1(%arg0: i32) -> (i32, i32) {
    %c0_i32 = arith.constant 0 : i32
    %c0_i32_0 = arith.constant 0 : i32
    %c0_i32_1 = arith.constant 0 : i32
    return %c0_i32, %c0_i32_0 : i32, i32
  }
  func.func @transform_2(%arg0: i32) -> (i32, i32) {
    %c0_i32 = arith.constant 0 : i32
    %c0_i32_0 = arith.constant 0 : i32
    %c0_i32_1 = arith.constant 0 : i32
    return %c0_i32, %c0_i32_0 : i32, i32
  }
  func.func @transform_3(%arg0: i32) -> (i32, i32) {
    %c0_i32 = arith.constant 0 : i32
    %c0_i32_0 = arith.constant 0 : i32
    %c0_i32_1 = arith.constant 0 : i32
    return %c0_i32, %c0_i32_0 : i32, i32
  }
  func.func @transform_4(%arg0: i32) -> (i32, i32) {
    %c0_i32 = arith.constant 0 : i32
    %c0_i32_0 = arith.constant 0 : i32
    %c0_i32_1 = arith.constant 0 : i32
    return %c0_i32, %c0_i32_0 : i32, i32
  }
}

</mosaic_0001>

<llo_original>
// kernel: tpu_custom_call.1
$region0: #{tpu_custom_call.1}
  #allocation0 [shape = 'u32[]', space=smem, size = 0x4, offset = 0x4, fixed_abs, tag = 'smem constant byte address 0x4 - core index']
  #allocation1 [shape = 'u32[144,128]{1,0:T(1,128)}', space=vmem, size = 0x12000, scoped, tag = 'internal scratch']
  %s0 = inlined_call_operand.hbm [shape: f32[8,256], index: 0, kind: input, shape index: {}]
  %s1 = inlined_call_operand.vmem [shape: f32[8,72], index: 1, kind: input, shape index: {}]
  %s2 = inlined_call_operand.vmem [shape: f32[8,1], index: 2, kind: input, shape index: {}]
  %s3 = inlined_call_operand.hbm [shape: f32[9,256], index: 3, kind: input, shape index: {}]
  %s4 = inlined_call_operand.hbm [shape: f32[8,256], index: 4, kind: output, shape index: {}]
  %s5 = sld [smem:[#allocation0]]
  $region34: #{tpu_custom_call.1} parent=0
    _
  %s7 = ssub.s32 1, %s5
  %s8 = scalar_select 0, %s7, %s5
  $region1: #{tpu_custom_call.1} parent=0
    #allocation2 [shape = 'u8[8192]{0}', space=vmem, size = 0x2000, scoped, tag = 'input window, operand 0, single buffered']
    #allocation3 [shape = 's32[1]{0}', space=sflag, size = 0x4, scoped, tag = 'scoped memory for tpu_custom_call.1']
    #allocation4 [shape = 's32[1]{0}', space=sflag, size = 0x4, scoped, tag = 'scoped memory for tpu_custom_call.1']
    #allocation5 [shape = 'u8[16384]{0}', space=vmem, size = 0x4000, scoped, tag = 'input window, operand 3, single buffered']
    #allocation6 [shape = 's32[1]{0}', space=sflag, size = 0x4, scoped, tag = 'scoped memory for tpu_custom_call.1']
    #allocation7 [shape = 'u8[8192]{0}', space=vmem, size = 0x2000, scoped, tag = 'output window, operand 0, single buffered']
    %9 = vsyncpa [#allocation3], 0
    %10 = vsyncpa [#allocation6], 0
    %11 = vsyncpa [#allocation4], 0
    // Predicated region
    $region2: #{tpu_custom_call.1} parent=1 // pred_check
      _
    $region3: #{tpu_custom_call.1} parent=1 // pred_check_branch
      %13 = sbr.rel (0) target = $region5
    $region4: #{tpu_custom_call.1} parent=1 // pred_region
      %s15 = ssub.s32 256, 256
      %16 = vsyncadd [#allocation3], %s15
      %s18 = sshll.u32 [#allocation2], 4
      %s19 = int_to_ptr.vmem [resolvable:$true] %s18
      %21 = dma.hbm_to_vmem [thread:$0]  %s0, 256, %s19, [#allocation3]
    $region5: #{tpu_custom_call.1} parent=1 // pred_fallthru
      _
    // Predicated region
    $region6: #{tpu_custom_call.1} parent=1 // pred_check
      _
    $region7: #{tpu_custom_call.1} parent=1 // pred_check_branch
      %23 = sbr.rel (0) target = $region9
    $region8: #{tpu_custom_call.1} parent=1 // pred_region
      _
    $region9: #{tpu_custom_call.1} parent=1 // pred_fallthru
      _
    // Predicated region
    $region10: #{tpu_custom_call.1} parent=1 // pred_check
      _
    $region11: #{tpu_custom_call.1} parent=1 // pred_check_branch
      %25 = sbr.rel (0) target = $region13
    $region12: #{tpu_custom_call.1} parent=1 // pred_region
      _
    $region13: #{tpu_custom_call.1} parent=1 // pred_fallthru
      _
    // Predicated region
    $region14: #{tpu_custom_call.1} parent=1 // pred_check
      _
    $region15: #{tpu_custom_call.1} parent=1 // pred_check_branch
      %27 = sbr.rel (0) target = $region17
    $region16: #{tpu_custom_call.1} parent=1 // pred_region
      %s29 = ssub.s32 512, 512
      %30 = vsyncadd [#allocation6], %s29
      %s31 = sshll.u32 [#allocation5], 4
      %s32 = int_to_ptr.vmem [resolvable:$true] %s31
      %37 = dma.hbm_to_vmem [thread:$0]  %s3, 512, %s32, [#allocation6], 256, 256, 16
    $region17: #{tpu_custom_call.1} parent=1 // pred_fallthru
      _
    // Predicated region
    $region18: #{tpu_custom_call.1} parent=1 // pred_check
      _
    $region19: #{tpu_custom_call.1} parent=1 // pred_check_branch
      %39 = sbr.rel (0) target = $region21
    $region20: #{tpu_custom_call.1} parent=1 // pred_region
      %40 = dma.done [#allocation3], 256
    $region21: #{tpu_custom_call.1} parent=1 // pred_fallthru
      _
    // Predicated region
    $region22: #{tpu_custom_call.1} parent=1 // pred_check
      _
    $region23: #{tpu_custom_call.1} parent=1 // pred_check_branch
      %42 = sbr.rel (0) target = $region25
    $region24: #{tpu_custom_call.1} parent=1 // pred_region
      %43 = dma.done [#allocation6], 512
    $region25: #{tpu_custom_call.1} parent=1 // pred_fallthru
      _
    %v44 = vld [vmem:[#allocation2] sm:$0xff]
    %v45 = vld [vmem:[#allocation2 + $0x8] sm:$0xff]
    %47 = vrot.lane.b32.xlu0 %v45, 17
    %v48 = vpop.permute.xlu0 %47
    %51 = vrot.lane.b32.xlu0 %v44, 17
    %v52 = vpop.permute.xlu0 %51
    %vm53 = vcmask 138240
    %v54 = vsel %vm53, %v52, %v48
    %v57 = vsel %vm53, %v48, %v52
    %v58 = vld [vmem:[#allocation5] ss:$8 sm:$0x3]
    %v60 = vlaneseq
    %v61 = vshrl.u32 %v60, 7
    %v62 = vsub.s32 0, %v61
    %v63 = vrot.slane %v58, %v62
    %v64 = vlaneseq
    %v65 = vshrl.u32 %v64, 7
    %v66 = vsub.s32 1, %v65
    %v67 = vrot.slane %v58, %v66
    %v70 = vmul.f32 %v57, %v63
    %v71 = vmul.f32 %v54, %v67
    %v72 = vld [vmem:[%s1] sm:$0xff]
    %74 = vset.pattern.permute.xlu0 0
    %75 = vperm.xlu0 %74, %v72
    %v76 = vpop.permute.xlu0 %75
    %v78 = vlaneseq
    %v79 = vshrl.u32 %v78, 7
    %v80 = vsub.s32 0, %v79
    %v81 = vrot.slane %v70, %v80
    %v82 = vlaneseq
    %v83 = vshrl.u32 %v82, 7
    %v84 = vsub.s32 0, %v83
    %v85 = vrot.slane %v71, %v84
    %v86 = vmul.f32 %v76, %v81
    %v87 = vmul.f32 %v76, %v85
    %v88 = vadd.f32 %v86, 0.0
    %v89 = vadd.f32 %v87, 0.0
    %90 = vset.pattern.permute.xlu0 1
    %91 = vperm.xlu0 %90, %v72
    %v92 = vpop.permute.xlu0 %91
    %v94 = vlaneseq
    %v95 = vshrl.u32 %v94, 7
    %v96 = vsub.s32 1, %v95
    %v97 = vrot.slane %v70, %v96
    %v98 = vlaneseq
    %v99 = vshrl.u32 %v98, 7
    %v100 = vsub.s32 1, %v99
    %v101 = vrot.slane %v71, %v100
    %v102 = vmul.f32 %v92, %v97
    %v103 = vmul.f32 %v92, %v101
    %v104 = vadd.f32 %v88, %v102
    %v105 = vadd.f32 %v89, %v103
    %106 = vset.pattern.permute.xlu0 2
    %107 = vperm.xlu0 %106, %v72
    %v108 = vpop.permute.xlu0 %107
    %v110 = vlaneseq
    %v111 = vshrl.u32 %v110, 7
    %v112 = vsub.s32 2, %v111
    %v113 = vrot.slane %v70, %v112
    %v114 = vlaneseq
    %v115 = vshrl.u32 %v114, 7
    %v116 = vsub.s32 2, %v115
    %v117 = vrot.slane %v71, %v116
    %v118 = vmul.f32 %v108, %v113
    %v119 = vmul.f32 %v108, %v117
    %v120 = vadd.f32 %v104, %v118
    %v121 = vadd.f32 %v105, %v119
    %122 = vset.pattern.permute.xlu0 3
    %123 = vperm.xlu0 %122, %v72
    %v124 = vpop.permute.xlu0 %123
    %v126 = vlaneseq
    %v127 = vshrl.u32 %v126, 7
    %v128 = vsub.s32 3, %v127
    %v129 = vrot.slane %v70, %v128
    %v130 = vlaneseq
    %v131 = vshrl.u32 %v130, 7
    %v132 = vsub.s32 3, %v131
    %v133 = vrot.slane %v71, %v132
    %v134 = vmul.f32 %v124, %v129
    %v135 = vmul.f32 %v124, %v133
    %v136 = vadd.f32 %v120, %v134
    %v137 = vadd.f32 %v121, %v135
    %138 = vset.pattern.permute.xlu0 4
    %139 = vperm.xlu0 %138, %v72
    %v140 = vpop.permute.xlu0 %139
    %v142 = vlaneseq
    %v143 = vshrl.u32 %v142, 7
    %v144 = vsub.s32 4, %v143
    %v145 = vrot.slane %v70, %v144
    %v146 = vlaneseq
    %v147 = vshrl.u32 %v146, 7
    %v148 = vsub.s32 4, %v147
    %v149 = vrot.slane %v71, %v148
    %v150 = vmul.f32 %v140, %v145
    %v151 = vmul.f32 %v140, %v149
    %v152 = vadd.f32 %v136, %v150
    %v153 = vadd.f32 %v137, %v151
    %154 = vset.pattern.permute.xlu0 5
    %155 = vperm.xlu0 %154, %v72
    %v156 = vpop.permute.xlu0 %155
    %v158 = vlaneseq
    %v159 = vshrl.u32 %v158, 7
    %v160 = vsub.s32 5, %v159
    %v161 = vrot.slane %v70, %v160
    %v162 = vlaneseq
    %v163 = vshrl.u32 %v162, 7
    %v164 = vsub.s32 5, %v163
    %v165 = vrot.slane %v71, %v164
    %v166 = vmul.f32 %v156, %v161
    %v167 = vmul.f32 %v156, %v165
    %v168 = vadd.f32 %v152, %v166
    %v169 = vadd.f32 %v153, %v167
    %170 = vset.pattern.permute.xlu0 6
    %171 = vperm.xlu0 %170, %v72
    %v172 = vpop.permute.xlu0 %171
    %v174 = vlaneseq
    %v175 = vshrl.u32 %v174, 7
    %v176 = vsub.s32 6, %v175
    %v177 = vrot.slane %v70, %v176
    %v178 = vlaneseq
    %v179 = vshrl.u32 %v178, 7
    %v180 = vsub.s32 6, %v179
    %v181 = vrot.slane %v71, %v180
    %v182 = vmul.f32 %v172, %v177
    %v183 = vmul.f32 %v172, %v181
    %v184 = vadd.f32 %v168, %v182
    %v185 = vadd.f32 %v169, %v183
    %186 = vset.pattern.permute.xlu0 7
    %187 = vperm.xlu0 %186, %v72
    %v188 = vpop.permute.xlu0 %187
    %v190 = vlaneseq
    %v191 = vshrl.u32 %v190, 7
    %v192 = vsub.s32 7, %v191
    %v193 = vrot.slane %v70, %v192
    %v194 = vlaneseq
    %v195 = vshrl.u32 %v194, 7
    %v196 = vsub.s32 7, %v195
    %v197 = vrot.slane %v71, %v196
    %v198 = vmul.f32 %v188, %v193
    %v199 = vmul.f32 %v188, %v197
    %v200 = vadd.f32 %v184, %v198
    %v201 = vadd.f32 %v185, %v199
    %202 = vrot.lane.b32.xlu0 %v45, 16
    %v203 = vpop.permute.xlu0 %202
    %205 = vrot.lane.b32.xlu0 %v44, 16
    %v206 = vpop.permute.xlu0 %205
    %vm207 = vcmask 130048
    %v208 = vsel %vm207, %v206, %v203
    %v211 = vsel %vm207, %v203, %v206
    %s212 = scalar_lea.vmem [#allocation5], 1
    %v213 = vld [vmem:[%s212] ss:$8 sm:$0x3]
    %v215 = vlaneseq
    %v216 = vshrl.u32 %v215, 7
    %v217 = vsub.s32 0, %v216
    %v218 = vrot.slane %v213, %v217
    %v219 = vlaneseq
    %v220 = vshrl.u32 %v219, 7
    %v221 = vsub.s32 1, %v220
    %v222 = vrot.slane %v213, %v221
    %v225 = vmul.f32 %v211, %v218
    %v226 = vmul.f32 %v208, %v222
    %227 = vset.pattern.permute.xlu0 8
    %228 = vperm.xlu0 %227, %v72
    %v229 = vpop.permute.xlu0 %228
    %v231 = vlaneseq
    %v232 = vshrl.u32 %v231, 7
    %v233 = vsub.s32 0, %v232
    %v234 = vrot.slane %v225, %v233
    %v235 = vlaneseq
    %v236 = vshrl.u32 %v235, 7
    %v237 = vsub.s32 0, %v236
    %v238 = vrot.slane %v226, %v237
    %v239 = vmul.f32 %v229, %v234
    %v240 = vmul.f32 %v229, %v238
    %v241 = vadd.f32 %v200, %v239
    %v242 = vadd.f32 %v201, %v240
    %243 = vset.pattern.permute.xlu0 9
    %244 = vperm.xlu0 %243, %v72
    %v245 = vpop.permute.xlu0 %244
    %v247 = vlaneseq
    %v248 = vshrl.u32 %v247, 7
    %v249 = vsub.s32 1, %v248
    %v250 = vrot.slane %v225, %v249
    %v251 = vlaneseq
    %v252 = vshrl.u32 %v251, 7
    %v253 = vsub.s32 1, %v252
    %v254 = vrot.slane %v226, %v253
    %v255 = vmul.f32 %v245, %v250
    %v256 = vmul.f32 %v245, %v254
    %v257 = vadd.f32 %v241, %v255
    %v258 = vadd.f32 %v242, %v256
    %259 = vset.pattern.permute.xlu0 10
    %260 = vperm.xlu0 %259, %v72
    %v261 = vpop.permute.xlu0 %260
    %v263 = vlaneseq
    %v264 = vshrl.u32 %v263, 7
    %v265 = vsub.s32 2, %v264
    %v266 = vrot.slane %v225, %v265
    %v267 = vlaneseq
    %v268 = vshrl.u32 %v267, 7
    %v269 = vsub.s32 2, %v268
    %v270 = vrot.slane %v226, %v269
    %v271 = vmul.f32 %v261, %v266
    %v272 = vmul.f32 %v261, %v270
    %v273 = vadd.f32 %v257, %v271
    %v274 = vadd.f32 %v258, %v272
    %275 = vset.pattern.permute.xlu0 11
    %276 = vperm.xlu0 %275, %v72
    %v277 = vpop.permute.xlu0 %276
    %v279 = vlaneseq
    %v280 = vshrl.u32 %v279, 7
    %v281 = vsub.s32 3, %v280
    %v282 = vrot.slane %v225, %v281
    %v283 = vlaneseq
    %v284 = vshrl.u32 %v283, 7
    %v285 = vsub.s32 3, %v284
    %v286 = vrot.slane %v226, %v285
    %v287 = vmul.f32 %v277, %v282
    %v288 = vmul.f32 %v277, %v286
    %v289 = vadd.f32 %v273, %v287
    %v290 = vadd.f32 %v274, %v288
    %291 = vset.pattern.permute.xlu0 12
    %292 = vperm.xlu0 %291, %v72
    %v293 = vpop.permute.xlu0 %292
    %v295 = vlaneseq
    %v296 = vshrl.u32 %v295, 7
    %v297 = vsub.s32 4, %v296
    %v298 = vrot.slane %v225, %v297
    %v299 = vlaneseq
    %v300 = vshrl.u32 %v299, 7
    %v301 = vsub.s32 4, %v300
    %v302 = vrot.slane %v226, %v301
    %v303 = vmul.f32 %v293, %v298
    %v304 = vmul.f32 %v293, %v302
    %v305 = vadd.f32 %v289, %v303
    %v306 = vadd.f32 %v290, %v304
    %307 = vset.pattern.permute.xlu0 13
    %308 = vperm.xlu0 %307, %v72
    %v309 = vpop.permute.xlu0 %308
    %v311 = vlaneseq
    %v312 = vshrl.u32 %v311, 7
    %v313 = vsub.s32 5, %v312
    %v314 = vrot.slane %v225, %v313
    %v315 = vlaneseq
    %v316 = vshrl.u32 %v315, 7
    %v317 = vsub.s32 5, %v316
    %v318 = vrot.slane %v226, %v317
    %v319 = vmul.f32 %v309, %v314
    %v320 = vmul.f32 %v309, %v318
    %v321 = vadd.f32 %v305, %v319
    %v322 = vadd.f32 %v306, %v320
    %323 = vset.pattern.permute.xlu0 14
    %324 = vperm.xlu0 %323, %v72
    %v325 = vpop.permute.xlu0 %324
    %v327 = vlaneseq
    %v328 = vshrl.u32 %v327, 7
    %v329 = vsub.s32 6, %v328
    %v330 = vrot.slane %v225, %v329
    %v331 = vlaneseq
    %v332 = vshrl.u32 %v331, 7
    %v333 = vsub.s32 6, %v332
    %v334 = vrot.slane %v226, %v333
    %v335 = vmul.f32 %v325, %v330
    %v336 = vmul.f32 %v325, %v334
    %v337 = vadd.f32 %v321, %v335
    %v338 = vadd.f32 %v322, %v336
    %339 = vset.pattern.permute.xlu0 15
    %340 = vperm.xlu0 %339, %v72
    %v341 = vpop.permute.xlu0 %340
    %v343 = vlaneseq
    %v344 = vshrl.u32 %v343, 7
    %v345 = vsub.s32 7, %v344
    %v346 = vrot.slane %v225, %v345
    %v347 = vlaneseq
    %v348 = vshrl.u32 %v347, 7
    %v349 = vsub.s32 7, %v348
    %v350 = vrot.slane %v226, %v349
    %v351 = vmul.f32 %v341, %v346
    %v352 = vmul.f32 %v341, %v350
    %v353 = vadd.f32 %v337, %v351
    %v354 = vadd.f32 %v338, %v352
    %355 = vrot.lane.b32.xlu0 %v45, 15
    %v356 = vpop.permute.xlu0 %355
    %358 = vrot.lane.b32.xlu0 %v44, 15
    %v359 = vpop.permute.xlu0 %358
    %vm360 = vcmask 121856
    %v361 = vsel %vm360, %v359, %v356
    %v364 = vsel %vm360, %v356, %v359
    %s365 = scalar_lea.vmem [#allocation5], 2
    %v366 = vld [vmem:[%s365] ss:$8 sm:$0x3]
    %v368 = vlaneseq
    %v369 = vshrl.u32 %v368, 7
    %v370 = vsub.s32 0, %v369
    %v371 = vrot.slane %v366, %v370
    %v372 = vlaneseq
    %v373 = vshrl.u32 %v372, 7
    %v374 = vsub.s32 1, %v373
    %v375 = vrot.slane %v366, %v374
    %v378 = vmul.f32 %v364, %v371
    %v379 = vmul.f32 %v361, %v375
    %380 = vset.pattern.permute.xlu0 16
    %381 = vperm.xlu0 %380, %v72
    %v382 = vpop.permute.xlu0 %381
    %v384 = vlaneseq
    %v385 = vshrl.u32 %v384, 7
    %v386 = vsub.s32 0, %v385
    %v387 = vrot.slane %v378, %v386
    %v388 = vlaneseq
    %v389 = vshrl.u32 %v388, 7
    %v390 = vsub.s32 0, %v389
    %v391 = vrot.slane %v379, %v390
    %v392 = vmul.f32 %v382, %v387
    %v393 = vmul.f32 %v382, %v391
    %v394 = vadd.f32 %v353, %v392
    %v395 = vadd.f32 %v354, %v393
    %396 = vset.pattern.permute.xlu0 17
    %397 = vperm.xlu0 %396, %v72
    %v398 = vpop.permute.xlu0 %397
    %v400 = vlaneseq
    %v401 = vshrl.u32 %v400, 7
    %v402 = vsub.s32 1, %v401
    %v403 = vrot.slane %v378, %v402
    %v404 = vlaneseq
    %v405 = vshrl.u32 %v404, 7
    %v406 = vsub.s32 1, %v405
    %v407 = vrot.slane %v379, %v406
    %v408 = vmul.f32 %v398, %v403
    %v409 = vmul.f32 %v398, %v407
    %v410 = vadd.f32 %v394, %v408
    %v411 = vadd.f32 %v395, %v409
    %412 = vset.pattern.permute.xlu0 18
    %413 = vperm.xlu0 %412, %v72
    %v414 = vpop.permute.xlu0 %413
    %v416 = vlaneseq
    %v417 = vshrl.u32 %v416, 7
    %v418 = vsub.s32 2, %v417
    %v419 = vrot.slane %v378, %v418
    %v420 = vlaneseq
    %v421 = vshrl.u32 %v420, 7
    %v422 = vsub.s32 2, %v421
    %v423 = vrot.slane %v379, %v422
    %v424 = vmul.f32 %v414, %v419
    %v425 = vmul.f32 %v414, %v423
    %v426 = vadd.f32 %v410, %v424
    %v427 = vadd.f32 %v411, %v425
    %428 = vset.pattern.permute.xlu0 19
    %429 = vperm.xlu0 %428, %v72
    %v430 = vpop.permute.xlu0 %429
    %v432 = vlaneseq
    %v433 = vshrl.u32 %v432, 7
    %v434 = vsub.s32 3, %v433
    %v435 = vrot.slane %v378, %v434
    %v436 = vlaneseq
    %v437 = vshrl.u32 %v436, 7
    %v438 = vsub.s32 3, %v437
    %v439 = vrot.slane %v379, %v438
    %v440 = vmul.f32 %v430, %v435
    %v441 = vmul.f32 %v430, %v439
    %v442 = vadd.f32 %v426, %v440
    %v443 = vadd.f32 %v427, %v441
    %444 = vset.pattern.permute.xlu0 20
    %445 = vperm.xlu0 %444, %v72
    %v446 = vpop.permute.xlu0 %445
    %v448 = vlaneseq
    %v449 = vshrl.u32 %v448, 7
    %v450 = vsub.s32 4, %v449
    %v451 = vrot.slane %v378, %v450
    %v452 = vlaneseq
    %v453 = vshrl.u32 %v452, 7
    %v454 = vsub.s32 4, %v453
    %v455 = vrot.slane %v379, %v454
    %v456 = vmul.f32 %v446, %v451
    %v457 = vmul.f32 %v446, %v455
    %v458 = vadd.f32 %v442, %v456
    %v459 = vadd.f32 %v443, %v457
    %460 = vset.pattern.permute.xlu0 21
    %461 = vperm.xlu0 %460, %v72
    %v462 = vpop.permute.xlu0 %461
    %v464 = vlaneseq
    %v465 = vshrl.u32 %v464, 7
    %v466 = vsub.s32 5, %v465
    %v467 = vrot.slane %v378, %v466
    %v468 = vlaneseq
    %v469 = vshrl.u32 %v468, 7
    %v470 = vsub.s32 5, %v469
    %v471 = vrot.slane %v379, %v470
    %v472 = vmul.f32 %v462, %v467
    %v473 = vmul.f32 %v462, %v471
    %v474 = vadd.f32 %v458, %v472
    %v475 = vadd.f32 %v459, %v473
    %476 = vset.pattern.permute.xlu0 22
    %477 = vperm.xlu0 %476, %v72
    %v478 = vpop.permute.xlu0 %477
    %v480 = vlaneseq
    %v481 = vshrl.u32 %v480, 7
    %v482 = vsub.s32 6, %v481
    %v483 = vrot.slane %v378, %v482
    %v484 = vlaneseq
    %v485 = vshrl.u32 %v484, 7
    %v486 = vsub.s32 6, %v485
    %v487 = vrot.slane %v379, %v486
    %v488 = vmul.f32 %v478, %v483
    %v489 = vmul.f32 %v478, %v487
    %v490 = vadd.f32 %v474, %v488
    %v491 = vadd.f32 %v475, %v489
    %492 = vset.pattern.permute.xlu0 23
    %493 = vperm.xlu0 %492, %v72
    %v494 = vpop.permute.xlu0 %493
    %v496 = vlaneseq
    %v497 = vshrl.u32 %v496, 7
    %v498 = vsub.s32 7, %v497
    %v499 = vrot.slane %v378, %v498
    %v500 = vlaneseq
    %v501 = vshrl.u32 %v500, 7
    %v502 = vsub.s32 7, %v501
    %v503 = vrot.slane %v379, %v502
    %v504 = vmul.f32 %v494, %v499
    %v505 = vmul.f32 %v494, %v503
    %v506 = vadd.f32 %v490, %v504
    %v507 = vadd.f32 %v491, %v505
    %508 = vrot.lane.b32.xlu0 %v45, 1
    %v509 = vpop.permute.xlu0 %508
    %511 = vrot.lane.b32.xlu0 %v44, 1
    %v512 = vpop.permute.xlu0 %511
    %vm513 = vcmask 7168
    %v514 = vsel %vm513, %v512, %v509
    %v517 = vsel %vm513, %v509, %v512
    %s518 = scalar_lea.vmem [#allocation5], 3
    %v519 = vld [vmem:[%s518] ss:$8 sm:$0x3]
    %v521 = vlaneseq
    %v522 = vshrl.u32 %v521, 7
    %v523 = vsub.s32 0, %v522
    %v524 = vrot.slane %v519, %v523
    %v525 = vlaneseq
    %v526 = vshrl.u32 %v525, 7
    %v527 = vsub.s32 1, %v526
    %v528 = vrot.slane %v519, %v527
    %v531 = vmul.f32 %v517, %v524
    %v532 = vmul.f32 %v514, %v528
    %533 = vset.pattern.permute.xlu0 24
    %534 = vperm.xlu0 %533, %v72
    %v535 = vpop.permute.xlu0 %534
    %v537 = vlaneseq
    %v538 = vshrl.u32 %v537, 7
    %v539 = vsub.s32 0, %v538
    %v540 = vrot.slane %v531, %v539
    %v541 = vlaneseq
    %v542 = vshrl.u32 %v541, 7
    %v543 = vsub.s32 0, %v542
    %v544 = vrot.slane %v532, %v543
    %v545 = vmul.f32 %v535, %v540
    %v546 = vmul.f32 %v535, %v544
    %v547 = vadd.f32 %v506, %v545
    %v548 = vadd.f32 %v507, %v546
    %549 = vset.pattern.permute.xlu0 25
    %550 = vperm.xlu0 %549, %v72
    %v551 = vpop.permute.xlu0 %550
    %v553 = vlaneseq
    %v554 = vshrl.u32 %v553, 7
    %v555 = vsub.s32 1, %v554
    %v556 = vrot.slane %v531, %v555
    %v557 = vlaneseq
    %v558 = vshrl.u32 %v557, 7
    %v559 = vsub.s32 1, %v558
    %v560 = vrot.slane %v532, %v559
    %v561 = vmul.f32 %v551, %v556
    %v562 = vmul.f32 %v551, %v560
    %v563 = vadd.f32 %v547, %v561
    %v564 = vadd.f32 %v548, %v562
    %565 = vset.pattern.permute.xlu0 26
    %566 = vperm.xlu0 %565, %v72
    %v567 = vpop.permute.xlu0 %566
    %v569 = vlaneseq
    %v570 = vshrl.u32 %v569, 7
    %v571 = vsub.s32 2, %v570
    %v572 = vrot.slane %v531, %v571
    %v573 = vlaneseq
    %v574 = vshrl.u32 %v573, 7
    %v575 = vsub.s32 2, %v574
    %v576 = vrot.slane %v532, %v575
    %v577 = vmul.f32 %v567, %v572
    %v578 = vmul.f32 %v567, %v576
    %v579 = vadd.f32 %v563, %v577
    %v580 = vadd.f32 %v564, %v578
    %581 = vset.pattern.permute.xlu0 27
    %582 = vperm.xlu0 %581, %v72
    %v583 = vpop.permute.xlu0 %582
    %v585 = vlaneseq
    %v586 = vshrl.u32 %v585, 7
    %v587 = vsub.s32 3, %v586
    %v588 = vrot.slane %v531, %v587
    %v589 = vlaneseq
    %v590 = vshrl.u32 %v589, 7
    %v591 = vsub.s32 3, %v590
    %v592 = vrot.slane %v532, %v591
    %v593 = vmul.f32 %v583, %v588
    %v594 = vmul.f32 %v583, %v592
    %v595 = vadd.f32 %v579, %v593
    %v596 = vadd.f32 %v580, %v594
    %597 = vset.pattern.permute.xlu0 28
    %598 = vperm.xlu0 %597, %v72
    %v599 = vpop.permute.xlu0 %598
    %v601 = vlaneseq
    %v602 = vshrl.u32 %v601, 7
    %v603 = vsub.s32 4, %v602
    %v604 = vrot.slane %v531, %v603
    %v605 = vlaneseq
    %v606 = vshrl.u32 %v605, 7
    %v607 = vsub.s32 4, %v606
    %v608 = vrot.slane %v532, %v607
    %v609 = vmul.f32 %v599, %v604
    %v610 = vmul.f32 %v599, %v608
    %v611 = vadd.f32 %v595, %v609
    %v612 = vadd.f32 %v596, %v610
    %613 = vset.pattern.permute.xlu0 29
    %614 = vperm.xlu0 %613, %v72
    %v615 = vpop.permute.xlu0 %614
    %v617 = vlaneseq
    %v618 = vshrl.u32 %v617, 7
    %v619 = vsub.s32 5, %v618
    %v620 = vrot.slane %v531, %v619
    %v621 = vlaneseq
    %v622 = vshrl.u32 %v621, 7
    %v623 = vsub.s32 5, %v622
    %v624 = vrot.slane %v532, %v623
    %v625 = vmul.f32 %v615, %v620
    %v626 = vmul.f32 %v615, %v624
    %v627 = vadd.f32 %v611, %v625
    %v628 = vadd.f32 %v612, %v626
    %629 = vset.pattern.permute.xlu0 30
    %630 = vperm.xlu0 %629, %v72
    %v631 = vpop.permute.xlu0 %630
    %v633 = vlaneseq
    %v634 = vshrl.u32 %v633, 7
    %v635 = vsub.s32 6, %v634
    %v636 = vrot.slane %v531, %v635
    %v637 = vlaneseq
    %v638 = vshrl.u32 %v637, 7
    %v639 = vsub.s32 6, %v638
    %v640 = vrot.slane %v532, %v639
    %v641 = vmul.f32 %v631, %v636
    %v642 = vmul.f32 %v631, %v640
    %v643 = vadd.f32 %v627, %v641
    %v644 = vadd.f32 %v628, %v642
    %645 = vset.pattern.permute.xlu0 31
    %646 = vperm.xlu0 %645, %v72
    %v647 = vpop.permute.xlu0 %646
    %v649 = vlaneseq
    %v650 = vshrl.u32 %v649, 7
    %v651 = vsub.s32 7, %v650
    %v652 = vrot.slane %v531, %v651
    %v653 = vlaneseq
    %v654 = vshrl.u32 %v653, 7
    %v655 = vsub.s32 7, %v654
    %v656 = vrot.slane %v532, %v655
    %v657 = vmul.f32 %v647, %v652
    %v658 = vmul.f32 %v647, %v656
    %v659 = vadd.f32 %v643, %v657
    %v660 = vadd.f32 %v644, %v658
    %661 = vset.pattern.permute.xlu0 32
    %662 = vperm.xlu0 %661, %v72
    %v663 = vpop.permute.xlu0 %662
    %v665 = vlaneseq
    %v666 = vshrl.u32 %v665, 7
    %v667 = vsub.s32 0, %v666
    %v668 = vrot.slane %v44, %v667
    %v669 = vlaneseq
    %v670 = vshrl.u32 %v669, 7
    %v671 = vsub.s32 0, %v670
    %v672 = vrot.slane %v45, %v671
    %v673 = vmul.f32 %v663, %v668
    %v674 = vmul.f32 %v663, %v672
    %v675 = vadd.f32 %v659, %v673
    %v676 = vadd.f32 %v660, %v674
    %677 = vset.pattern.permute.xlu0 33
    %678 = vperm.xlu0 %677, %v72
    %v679 = vpop.permute.xlu0 %678
    %v681 = vlaneseq
    %v682 = vshrl.u32 %v681, 7
    %v683 = vsub.s32 1, %v682
    %v684 = vrot.slane %v44, %v683
    %v685 = vlaneseq
    %v686 = vshrl.u32 %v685, 7
    %v687 = vsub.s32 1, %v686
    %v688 = vrot.slane %v45, %v687
    %v689 = vmul.f32 %v679, %v684
    %v690 = vmul.f32 %v679, %v688
    %v691 = vadd.f32 %v675, %v689
    %v692 = vadd.f32 %v676, %v690
    %693 = vset.pattern.permute.xlu0 34
    %694 = vperm.xlu0 %693, %v72
    %v695 = vpop.permute.xlu0 %694
    %v697 = vlaneseq
    %v698 = vshrl.u32 %v697, 7
    %v699 = vsub.s32 2, %v698
    %v700 = vrot.slane %v44, %v699
    %v701 = vlaneseq
    %v702 = vshrl.u32 %v701, 7
    %v703 = vsub.s32 2, %v702
    %v704 = vrot.slane %v45, %v703
    %v705 = vmul.f32 %v695, %v700
    %v706 = vmul.f32 %v695, %v704
    %v707 = vadd.f32 %v691, %v705
    %v708 = vadd.f32 %v692, %v706
    %709 = vset.pattern.permute.xlu0 35
    %710 = vperm.xlu0 %709, %v72
    %v711 = vpop.permute.xlu0 %710
    %v713 = vlaneseq
    %v714 = vshrl.u32 %v713, 7
    %v715 = vsub.s32 3, %v714
    %v716 = vrot.slane %v44, %v715
    %v717 = vlaneseq
    %v718 = vshrl.u32 %v717, 7
    %v719 = vsub.s32 3, %v718
    %v720 = vrot.slane %v45, %v719
    %v721 = vmul.f32 %v711, %v716
    %v722 = vmul.f32 %v711, %v720
    %v723 = vadd.f32 %v707, %v721
    %v724 = vadd.f32 %v708, %v722
    %725 = vset.pattern.permute.xlu0 36
    %726 = vperm.xlu0 %725, %v72
    %v727 = vpop.permute.xlu0 %726
    %v729 = vlaneseq
    %v730 = vshrl.u32 %v729, 7
    %v731 = vsub.s32 4, %v730
    %v732 = vrot.slane %v44, %v731
    %v733 = vlaneseq
    %v734 = vshrl.u32 %v733, 7
    %v735 = vsub.s32 4, %v734
    %v736 = vrot.slane %v45, %v735
    %v737 = vmul.f32 %v727, %v732
    %v738 = vmul.f32 %v727, %v736
    %v739 = vadd.f32 %v723, %v737
    %v740 = vadd.f32 %v724, %v738
    %741 = vset.pattern.permute.xlu0 37
    %742 = vperm.xlu0 %741, %v72
    %v743 = vpop.permute.xlu0 %742
    %v745 = vlaneseq
    %v746 = vshrl.u32 %v745, 7
    %v747 = vsub.s32 5, %v746
    %v748 = vrot.slane %v44, %v747
    %v749 = vlaneseq
    %v750 = vshrl.u32 %v749, 7
    %v751 = vsub.s32 5, %v750
    %v752 = vrot.slane %v45, %v751
    %v753 = vmul.f32 %v743, %v748
    %v754 = vmul.f32 %v743, %v752
    %v755 = vadd.f32 %v739, %v753
    %v756 = vadd.f32 %v740, %v754
    %757 = vset.pattern.permute.xlu0 38
    %758 = vperm.xlu0 %757, %v72
    %v759 = vpop.permute.xlu0 %758
    %v761 = vlaneseq
    %v762 = vshrl.u32 %v761, 7
    %v763 = vsub.s32 6, %v762
    %v764 = vrot.slane %v44, %v763
    %v765 = vlaneseq
    %v766 = vshrl.u32 %v765, 7
    %v767 = vsub.s32 6, %v766
    %v768 = vrot.slane %v45, %v767
    %v769 = vmul.f32 %v759, %v764
    %v770 = vmul.f32 %v759, %v768
    %v771 = vadd.f32 %v755, %v769
    %v772 = vadd.f32 %v756, %v770
    %773 = vset.pattern.permute.xlu0 39
    %774 = vperm.xlu0 %773, %v72
    %v775 = vpop.permute.xlu0 %774
    %v777 = vlaneseq
    %v778 = vshrl.u32 %v777, 7
    %v779 = vsub.s32 7, %v778
    %v780 = vrot.slane %v44, %v779
    %v781 = vlaneseq
    %v782 = vshrl.u32 %v781, 7
    %v783 = vsub.s32 7, %v782
    %v784 = vrot.slane %v45, %v783
    %v785 = vmul.f32 %v775, %v780
    %v786 = vmul.f32 %v775, %v784
    %v787 = vadd.f32 %v771, %v785
    %v788 = vadd.f32 %v772, %v786
    %789 = vrot.lane.b32.xlu0 %v44, 127
    %v790 = vpop.permute.xlu0 %789
    %791 = vrot.lane.b32.xlu0 %v45, 127
    %v792 = vpop.permute.xlu0 %791
    %vm793 = vcmask 1039360
    %v794 = vsel %vm793, %v790, %v792
    %v798 = vsel %vm793, %v792, %v790
    %s799 = scalar_lea.vmem [#allocation5], 5
    %v800 = vld [vmem:[%s799] ss:$8 sm:$0x3]
    %v802 = vlaneseq
    %v803 = vshrl.u32 %v802, 7
    %v804 = vsub.s32 0, %v803
    %v805 = vrot.slane %v800, %v804
    %v806 = vlaneseq
    %v807 = vshrl.u32 %v806, 7
    %v808 = vsub.s32 1, %v807
    %v809 = vrot.slane %v800, %v808
    %v812 = vmul.f32 %v794, %v805
    %v813 = vmul.f32 %v798, %v809
    %814 = vset.pattern.permute.xlu0 40
    %815 = vperm.xlu0 %814, %v72
    %v816 = vpop.permute.xlu0 %815
    %v818 = vlaneseq
    %v819 = vshrl.u32 %v818, 7
    %v820 = vsub.s32 0, %v819
    %v821 = vrot.slane %v812, %v820
    %v822 = vlaneseq
    %v823 = vshrl.u32 %v822, 7
    %v824 = vsub.s32 0, %v823
    %v825 = vrot.slane %v813, %v824
    %v826 = vmul.f32 %v816, %v821
    %v827 = vmul.f32 %v816, %v825
    %v828 = vadd.f32 %v787, %v826
    %v829 = vadd.f32 %v788, %v827
    %830 = vset.pattern.permute.xlu0 41
    %831 = vperm.xlu0 %830, %v72
    %v832 = vpop.permute.xlu0 %831
    %v834 = vlaneseq
    %v835 = vshrl.u32 %v834, 7
    %v836 = vsub.s32 1, %v835
    %v837 = vrot.slane %v812, %v836
    %v838 = vlaneseq
    %v839 = vshrl.u32 %v838, 7
    %v840 = vsub.s32 1, %v839
    %v841 = vrot.slane %v813, %v840
    %v842 = vmul.f32 %v832, %v837
    %v843 = vmul.f32 %v832, %v841
    %v844 = vadd.f32 %v828, %v842
    %v845 = vadd.f32 %v829, %v843
    %846 = vset.pattern.permute.xlu0 42
    %847 = vperm.xlu0 %846, %v72
    %v848 = vpop.permute.xlu0 %847
    %v850 = vlaneseq
    %v851 = vshrl.u32 %v850, 7
    %v852 = vsub.s32 2, %v851
    %v853 = vrot.slane %v812, %v852
    %v854 = vlaneseq
    %v855 = vshrl.u32 %v854, 7
    %v856 = vsub.s32 2, %v855
    %v857 = vrot.slane %v813, %v856
    %v858 = vmul.f32 %v848, %v853
    %v859 = vmul.f32 %v848, %v857
    %v860 = vadd.f32 %v844, %v858
    %v861 = vadd.f32 %v845, %v859
    %862 = vset.pattern.permute.xlu0 43
    %863 = vperm.xlu0 %862, %v72
    %v864 = vpop.permute.xlu0 %863
    %v866 = vlaneseq
    %v867 = vshrl.u32 %v866, 7
    %v868 = vsub.s32 3, %v867
    %v869 = vrot.slane %v812, %v868
    %v870 = vlaneseq
    %v871 = vshrl.u32 %v870, 7
    %v872 = vsub.s32 3, %v871
    %v873 = vrot.slane %v813, %v872
    %v874 = vmul.f32 %v864, %v869
    %v875 = vmul.f32 %v864, %v873
    %v876 = vadd.f32 %v860, %v874
    %v877 = vadd.f32 %v861, %v875
    %878 = vset.pattern.permute.xlu0 44
    %879 = vperm.xlu0 %878, %v72
    %v880 = vpop.permute.xlu0 %879
    %v882 = vlaneseq
    %v883 = vshrl.u32 %v882, 7
    %v884 = vsub.s32 4, %v883
    %v885 = vrot.slane %v812, %v884
    %v886 = vlaneseq
    %v887 = vshrl.u32 %v886, 7
    %v888 = vsub.s32 4, %v887
    %v889 = vrot.slane %v813, %v888
    %v890 = vmul.f32 %v880, %v885
    %v891 = vmul.f32 %v880, %v889
    %v892 = vadd.f32 %v876, %v890
    %v893 = vadd.f32 %v877, %v891
    %894 = vset.pattern.permute.xlu0 45
    %895 = vperm.xlu0 %894, %v72
    %v896 = vpop.permute.xlu0 %895
    %v898 = vlaneseq
    %v899 = vshrl.u32 %v898, 7
    %v900 = vsub.s32 5, %v899
    %v901 = vrot.slane %v812, %v900
    %v902 = vlaneseq
    %v903 = vshrl.u32 %v902, 7
    %v904 = vsub.s32 5, %v903
    %v905 = vrot.slane %v813, %v904
    %v906 = vmul.f32 %v896, %v901
    %v907 = vmul.f32 %v896, %v905
    %v908 = vadd.f32 %v892, %v906
    %v909 = vadd.f32 %v893, %v907
    %910 = vset.pattern.permute.xlu0 46
    %911 = vperm.xlu0 %910, %v72
    %v912 = vpop.permute.xlu0 %911
    %v914 = vlaneseq
    %v915 = vshrl.u32 %v914, 7
    %v916 = vsub.s32 6, %v915
    %v917 = vrot.slane %v812, %v916
    %v918 = vlaneseq
    %v919 = vshrl.u32 %v918, 7
    %v920 = vsub.s32 6, %v919
    %v921 = vrot.slane %v813, %v920
    %v922 = vmul.f32 %v912, %v917
    %v923 = vmul.f32 %v912, %v921
    %v924 = vadd.f32 %v908, %v922
    %v925 = vadd.f32 %v909, %v923
    %926 = vset.pattern.permute.xlu0 47
    %927 = vperm.xlu0 %926, %v72
    %v928 = vpop.permute.xlu0 %927
    %v930 = vlaneseq
    %v931 = vshrl.u32 %v930, 7
    %v932 = vsub.s32 7, %v931
    %v933 = vrot.slane %v812, %v932
    %v934 = vlaneseq
    %v935 = vshrl.u32 %v934, 7
    %v936 = vsub.s32 7, %v935
    %v937 = vrot.slane %v813, %v936
    %v938 = vmul.f32 %v928, %v933
    %v939 = vmul.f32 %v928, %v937
    %v940 = vadd.f32 %v924, %v938
    %v941 = vadd.f32 %v925, %v939
    %942 = vrot.lane.b32.xlu0 %v44, 113
    %v943 = vpop.permute.xlu0 %942
    %944 = vrot.lane.b32.xlu0 %v45, 113
    %v945 = vpop.permute.xlu0 %944
    %vm946 = vcmask 924672
    %v947 = vsel %vm946, %v943, %v945
    %v951 = vsel %vm946, %v945, %v943
    %s952 = scalar_lea.vmem [#allocation5], 6
    %v953 = vld [vmem:[%s952] ss:$8 sm:$0x3]
    %v955 = vlaneseq
    %v956 = vshrl.u32 %v955, 7
    %v957 = vsub.s32 0, %v956
    %v958 = vrot.slane %v953, %v957
    %v959 = vlaneseq
    %v960 = vshrl.u32 %v959, 7
    %v961 = vsub.s32 1, %v960
    %v962 = vrot.slane %v953, %v961
    %v965 = vmul.f32 %v947, %v958
    %v966 = vmul.f32 %v951, %v962
    %967 = vset.pattern.permute.xlu0 48
    %968 = vperm.xlu0 %967, %v72
    %v969 = vpop.permute.xlu0 %968
    %v971 = vlaneseq
    %v972 = vshrl.u32 %v971, 7
    %v973 = vsub.s32 0, %v972
    %v974 = vrot.slane %v965, %v973
    %v975 = vlaneseq
    %v976 = vshrl.u32 %v975, 7
    %v977 = vsub.s32 0, %v976
    %v978 = vrot.slane %v966, %v977
    %v979 = vmul.f32 %v969, %v974
    %v980 = vmul.f32 %v969, %v978
    %v981 = vadd.f32 %v940, %v979
    %v982 = vadd.f32 %v941, %v980
    %983 = vset.pattern.permute.xlu0 49
    %984 = vperm.xlu0 %983, %v72
    %v985 = vpop.permute.xlu0 %984
    %v987 = vlaneseq
    %v988 = vshrl.u32 %v987, 7
    %v989 = vsub.s32 1, %v988
    %v990 = vrot.slane %v965, %v989
    %v991 = vlaneseq
    %v992 = vshrl.u32 %v991, 7
    %v993 = vsub.s32 1, %v992
    %v994 = vrot.slane %v966, %v993
    %v995 = vmul.f32 %v985, %v990
    %v996 = vmul.f32 %v985, %v994
    %v997 = vadd.f32 %v981, %v995
    %v998 = vadd.f32 %v982, %v996
    %999 = vset.pattern.permute.xlu0 50
    %1000 = vperm.xlu0 %999, %v72
    %v1001 = vpop.permute.xlu0 %1000
    %v1003 = vlaneseq
    %v1004 = vshrl.u32 %v1003, 7
    %v1005 = vsub.s32 2, %v1004
    %v1006 = vrot.slane %v965, %v1005
    %v1007 = vlaneseq
    %v1008 = vshrl.u32 %v1007, 7
    %v1009 = vsub.s32 2, %v1008
    %v1010 = vrot.slane %v966, %v1009
    %v1011 = vmul.f32 %v1001, %v1006
    %v1012 = vmul.f32 %v1001, %v1010
    %v1013 = vadd.f32 %v997, %v1011
    %v1014 = vadd.f32 %v998, %v1012
    %1015 = vset.pattern.permute.xlu0 51
    %1016 = vperm.xlu0 %1015, %v72
    %v1017 = vpop.permute.xlu0 %1016
    %v1019 = vlaneseq
    %v1020 = vshrl.u32 %v1019, 7
    %v1021 = vsub.s32 3, %v1020
    %v1022 = vrot.slane %v965, %v1021
    %v1023 = vlaneseq
    %v1024 = vshrl.u32 %v1023, 7
    %v1025 = vsub.s32 3, %v1024
    %v1026 = vrot.slane %v966, %v1025
    %v1027 = vmul.f32 %v1017, %v1022
    %v1028 = vmul.f32 %v1017, %v1026
    %v1029 = vadd.f32 %v1013, %v1027
    %v1030 = vadd.f32 %v1014, %v1028
    %1031 = vset.pattern.permute.xlu0 52
    %1032 = vperm.xlu0 %1031, %v72
    %v1033 = vpop.permute.xlu0 %1032
    %v1035 = vlaneseq
    %v1036 = vshrl.u32 %v1035, 7
    %v1037 = vsub.s32 4, %v1036
    %v1038 = vrot.slane %v965, %v1037
    %v1039 = vlaneseq
    %v1040 = vshrl.u32 %v1039, 7
    %v1041 = vsub.s32 4, %v1040
    %v1042 = vrot.slane %v966, %v1041
    %v1043 = vmul.f32 %v1033, %v1038
    %v1044 = vmul.f32 %v1033, %v1042
    %v1045 = vadd.f32 %v1029, %v1043
    %v1046 = vadd.f32 %v1030, %v1044
    %1047 = vset.pattern.permute.xlu0 53
    %1048 = vperm.xlu0 %1047, %v72
    %v1049 = vpop.permute.xlu0 %1048
    %v1051 = vlaneseq
    %v1052 = vshrl.u32 %v1051, 7
    %v1053 = vsub.s32 5, %v1052
    %v1054 = vrot.slane %v965, %v1053
    %v1055 = vlaneseq
    %v1056 = vshrl.u32 %v1055, 7
    %v1057 = vsub.s32 5, %v1056
    %v1058 = vrot.slane %v966, %v1057
    %v1059 = vmul.f32 %v1049, %v1054
    %v1060 = vmul.f32 %v1049, %v1058
    %v1061 = vadd.f32 %v1045, %v1059
    %v1062 = vadd.f32 %v1046, %v1060
    %1063 = vset.pattern.permute.xlu0 54
    %1064 = vperm.xlu0 %1063, %v72
    %v1065 = vpop.permute.xlu0 %1064
    %v1067 = vlaneseq
    %v1068 = vshrl.u32 %v1067, 7
    %v1069 = vsub.s32 6, %v1068
    %v1070 = vrot.slane %v965, %v1069
    %v1071 = vlaneseq
    %v1072 = vshrl.u32 %v1071, 7
    %v1073 = vsub.s32 6, %v1072
    %v1074 = vrot.slane %v966, %v1073
    %v1075 = vmul.f32 %v1065, %v1070
    %v1076 = vmul.f32 %v1065, %v1074
    %v1077 = vadd.f32 %v1061, %v1075
    %v1078 = vadd.f32 %v1062, %v1076
    %1079 = vset.pattern.permute.xlu0 55
    %1080 = vperm.xlu0 %1079, %v72
    %v1081 = vpop.permute.xlu0 %1080
    %v1083 = vlaneseq
    %v1084 = vshrl.u32 %v1083, 7
    %v1085 = vsub.s32 7, %v1084
    %v1086 = vrot.slane %v965, %v1085
    %v1087 = vlaneseq
    %v1088 = vshrl.u32 %v1087, 7
    %v1089 = vsub.s32 7, %v1088
    %v1090 = vrot.slane %v966, %v1089
    %v1091 = vmul.f32 %v1081, %v1086
    %v1092 = vmul.f32 %v1081, %v1090
    %v1093 = vadd.f32 %v1077, %v1091
    %v1094 = vadd.f32 %v1078, %v1092
    %1095 = vrot.lane.b32.xlu0 %v44, 112
    %v1096 = vpop.permute.xlu0 %1095
    %1097 = vrot.lane.b32.xlu0 %v45, 112
    %v1098 = vpop.permute.xlu0 %1097
    %vm1099 = vcmask 916480
    %v1100 = vsel %vm1099, %v1096, %v1098
    %v1104 = vsel %vm1099, %v1098, %v1096
    %s1105 = scalar_lea.vmem [#allocation5], 7
    %v1106 = vld [vmem:[%s1105] ss:$8 sm:$0x3]
    %v1108 = vlaneseq
    %v1109 = vshrl.u32 %v1108, 7
    %v1110 = vsub.s32 0, %v1109
    %v1111 = vrot.slane %v1106, %v1110
    %v1112 = vlaneseq
    %v1113 = vshrl.u32 %v1112, 7
    %v1114 = vsub.s32 1, %v1113
    %v1115 = vrot.slane %v1106, %v1114
    %v1118 = vmul.f32 %v1100, %v1111
    %v1119 = vmul.f32 %v1104, %v1115
    %1120 = vset.pattern.permute.xlu0 56
    %1121 = vperm.xlu0 %1120, %v72
    %v1122 = vpop.permute.xlu0 %1121
    %v1124 = vlaneseq
    %v1125 = vshrl.u32 %v1124, 7
    %v1126 = vsub.s32 0, %v1125
    %v1127 = vrot.slane %v1118, %v1126
    %v1128 = vlaneseq
    %v1129 = vshrl.u32 %v1128, 7
    %v1130 = vsub.s32 0, %v1129
    %v1131 = vrot.slane %v1119, %v1130
    %v1132 = vmul.f32 %v1122, %v1127
    %v1133 = vmul.f32 %v1122, %v1131
    %v1134 = vadd.f32 %v1093, %v1132
    %v1135 = vadd.f32 %v1094, %v1133
    %1136 = vset.pattern.permute.xlu0 57
    %1137 = vperm.xlu0 %1136, %v72
    %v1138 = vpop.permute.xlu0 %1137
    %v1140 = vlaneseq
    %v1141 = vshrl.u32 %v1140, 7
    %v1142 = vsub.s32 1, %v1141
    %v1143 = vrot.slane %v1118, %v1142
    %v1144 = vlaneseq
    %v1145 = vshrl.u32 %v1144, 7
    %v1146 = vsub.s32 1, %v1145
    %v1147 = vrot.slane %v1119, %v1146
    %v1148 = vmul.f32 %v1138, %v1143
    %v1149 = vmul.f32 %v1138, %v1147
    %v1150 = vadd.f32 %v1134, %v1148
    %v1151 = vadd.f32 %v1135, %v1149
    %1152 = vset.pattern.permute.xlu0 58
    %1153 = vperm.xlu0 %1152, %v72
    %v1154 = vpop.permute.xlu0 %1153
    %v1156 = vlaneseq
    %v1157 = vshrl.u32 %v1156, 7
    %v1158 = vsub.s32 2, %v1157
    %v1159 = vrot.slane %v1118, %v1158
    %v1160 = vlaneseq
    %v1161 = vshrl.u32 %v1160, 7
    %v1162 = vsub.s32 2, %v1161
    %v1163 = vrot.slane %v1119, %v1162
    %v1164 = vmul.f32 %v1154, %v1159
    %v1165 = vmul.f32 %v1154, %v1163
    %v1166 = vadd.f32 %v1150, %v1164
    %v1167 = vadd.f32 %v1151, %v1165
    %1168 = vset.pattern.permute.xlu0 59
    %1169 = vperm.xlu0 %1168, %v72
    %v1170 = vpop.permute.xlu0 %1169
    %v1172 = vlaneseq
    %v1173 = vshrl.u32 %v1172, 7
    %v1174 = vsub.s32 3, %v1173
    %v1175 = vrot.slane %v1118, %v1174
    %v1176 = vlaneseq
    %v1177 = vshrl.u32 %v1176, 7
    %v1178 = vsub.s32 3, %v1177
    %v1179 = vrot.slane %v1119, %v1178
    %v1180 = vmul.f32 %v1170, %v1175
    %v1181 = vmul.f32 %v1170, %v1179
    %v1182 = vadd.f32 %v1166, %v1180
    %v1183 = vadd.f32 %v1167, %v1181
    %1184 = vset.pattern.permute.xlu0 60
    %1185 = vperm.xlu0 %1184, %v72
    %v1186 = vpop.permute.xlu0 %1185
    %v1188 = vlaneseq
    %v1189 = vshrl.u32 %v1188, 7
    %v1190 = vsub.s32 4, %v1189
    %v1191 = vrot.slane %v1118, %v1190
    %v1192 = vlaneseq
    %v1193 = vshrl.u32 %v1192, 7
    %v1194 = vsub.s32 4, %v1193
    %v1195 = vrot.slane %v1119, %v1194
    %v1196 = vmul.f32 %v1186, %v1191
    %v1197 = vmul.f32 %v1186, %v1195
    %v1198 = vadd.f32 %v1182, %v1196
    %v1199 = vadd.f32 %v1183, %v1197
    %1200 = vset.pattern.permute.xlu0 61
    %1201 = vperm.xlu0 %1200, %v72
    %v1202 = vpop.permute.xlu0 %1201
    %v1204 = vlaneseq
    %v1205 = vshrl.u32 %v1204, 7
    %v1206 = vsub.s32 5, %v1205
    %v1207 = vrot.slane %v1118, %v1206
    %v1208 = vlaneseq
    %v1209 = vshrl.u32 %v1208, 7
    %v1210 = vsub.s32 5, %v1209
    %v1211 = vrot.slane %v1119, %v1210
    %v1212 = vmul.f32 %v1202, %v1207
    %v1213 = vmul.f32 %v1202, %v1211
    %v1214 = vadd.f32 %v1198, %v1212
    %v1215 = vadd.f32 %v1199, %v1213
    %1216 = vset.pattern.permute.xlu0 62
    %1217 = vperm.xlu0 %1216, %v72
    %v1218 = vpop.permute.xlu0 %1217
    %v1220 = vlaneseq
    %v1221 = vshrl.u32 %v1220, 7
    %v1222 = vsub.s32 6, %v1221
    %v1223 = vrot.slane %v1118, %v1222
    %v1224 = vlaneseq
    %v1225 = vshrl.u32 %v1224, 7
    %v1226 = vsub.s32 6, %v1225
    %v1227 = vrot.slane %v1119, %v1226
    %v1228 = vmul.f32 %v1218, %v1223
    %v1229 = vmul.f32 %v1218, %v1227
    %v1230 = vadd.f32 %v1214, %v1228
    %v1231 = vadd.f32 %v1215, %v1229
    %1232 = vset.pattern.permute.xlu0 63
    %1233 = vperm.xlu0 %1232, %v72
    %v1234 = vpop.permute.xlu0 %1233
    %v1236 = vlaneseq
    %v1237 = vshrl.u32 %v1236, 7
    %v1238 = vsub.s32 7, %v1237
    %v1239 = vrot.slane %v1118, %v1238
    %v1240 = vlaneseq
    %v1241 = vshrl.u32 %v1240, 7
    %v1242 = vsub.s32 7, %v1241
    %v1243 = vrot.slane %v1119, %v1242
    %v1244 = vmul.f32 %v1234, %v1239
    %v1245 = vmul.f32 %v1234, %v1243
    %v1246 = vadd.f32 %v1230, %v1244
    %v1247 = vadd.f32 %v1231, %v1245
    %1248 = vrot.lane.b32.xlu0 %v44, 111
    %v1249 = vpop.permute.xlu0 %1248
    %1250 = vrot.lane.b32.xlu0 %v45, 111
    %v1251 = vpop.permute.xlu0 %1250
    %vm1252 = vcmask 908288
    %v1253 = vsel %vm1252, %v1249, %v1251
    %v1257 = vsel %vm1252, %v1251, %v1249
    %s1258 = scalar_lea.vmem [#allocation5], 16
    %v1259 = vld [vmem:[%s1258] ss:$8 sm:$0x3]
    %v1261 = vlaneseq
    %v1262 = vshrl.u32 %v1261, 7
    %v1263 = vsub.s32 0, %v1262
    %v1264 = vrot.slane %v1259, %v1263
    %v1265 = vlaneseq
    %v1266 = vshrl.u32 %v1265, 7
    %v1267 = vsub.s32 1, %v1266
    %v1268 = vrot.slane %v1259, %v1267
    %v1271 = vmul.f32 %v1253, %v1264
    %v1272 = vmul.f32 %v1257, %v1268
    %1273 = vset.pattern.permute.xlu0 64
    %1274 = vperm.xlu0 %1273, %v72
    %v1275 = vpop.permute.xlu0 %1274
    %v1277 = vlaneseq
    %v1278 = vshrl.u32 %v1277, 7
    %v1279 = vsub.s32 0, %v1278
    %v1280 = vrot.slane %v1271, %v1279
    %v1281 = vlaneseq
    %v1282 = vshrl.u32 %v1281, 7
    %v1283 = vsub.s32 0, %v1282
    %v1284 = vrot.slane %v1272, %v1283
    %v1285 = vmul.f32 %v1275, %v1280
    %v1286 = vmul.f32 %v1275, %v1284
    %v1287 = vadd.f32 %v1246, %v1285
    %v1288 = vadd.f32 %v1247, %v1286
    %1289 = vset.pattern.permute.xlu0 65
    %1290 = vperm.xlu0 %1289, %v72
    %v1291 = vpop.permute.xlu0 %1290
    %v1293 = vlaneseq
    %v1294 = vshrl.u32 %v1293, 7
    %v1295 = vsub.s32 1, %v1294
    %v1296 = vrot.slane %v1271, %v1295
    %v1297 = vlaneseq
    %v1298 = vshrl.u32 %v1297, 7
    %v1299 = vsub.s32 1, %v1298
    %v1300 = vrot.slane %v1272, %v1299
    %v1301 = vmul.f32 %v1291, %v1296
    %v1302 = vmul.f32 %v1291, %v1300
    %v1303 = vadd.f32 %v1287, %v1301
    %v1304 = vadd.f32 %v1288, %v1302
    %1305 = vset.pattern.permute.xlu0 66
    %1306 = vperm.xlu0 %1305, %v72
    %v1307 = vpop.permute.xlu0 %1306
    %v1309 = vlaneseq
    %v1310 = vshrl.u32 %v1309, 7
    %v1311 = vsub.s32 2, %v1310
    %v1312 = vrot.slane %v1271, %v1311
    %v1313 = vlaneseq
    %v1314 = vshrl.u32 %v1313, 7
    %v1315 = vsub.s32 2, %v1314
    %v1316 = vrot.slane %v1272, %v1315
    %v1317 = vmul.f32 %v1307, %v1312
    %v1318 = vmul.f32 %v1307, %v1316
    %v1319 = vadd.f32 %v1303, %v1317
    %v1320 = vadd.f32 %v1304, %v1318
    %1321 = vset.pattern.permute.xlu0 67
    %1322 = vperm.xlu0 %1321, %v72
    %v1323 = vpop.permute.xlu0 %1322
    %v1325 = vlaneseq
    %v1326 = vshrl.u32 %v1325, 7
    %v1327 = vsub.s32 3, %v1326
    %v1328 = vrot.slane %v1271, %v1327
    %v1329 = vlaneseq
    %v1330 = vshrl.u32 %v1329, 7
    %v1331 = vsub.s32 3, %v1330
    %v1332 = vrot.slane %v1272, %v1331
    %v1333 = vmul.f32 %v1323, %v1328
    %v1334 = vmul.f32 %v1323, %v1332
    %v1335 = vadd.f32 %v1319, %v1333
    %v1336 = vadd.f32 %v1320, %v1334
    %1337 = vset.pattern.permute.xlu0 68
    %1338 = vperm.xlu0 %1337, %v72
    %v1339 = vpop.permute.xlu0 %1338
    %v1341 = vlaneseq
    %v1342 = vshrl.u32 %v1341, 7
    %v1343 = vsub.s32 4, %v1342
    %v1344 = vrot.slane %v1271, %v1343
    %v1345 = vlaneseq
    %v1346 = vshrl.u32 %v1345, 7
    %v1347 = vsub.s32 4, %v1346
    %v1348 = vrot.slane %v1272, %v1347
    %v1349 = vmul.f32 %v1339, %v1344
    %v1350 = vmul.f32 %v1339, %v1348
    %v1351 = vadd.f32 %v1335, %v1349
    %v1352 = vadd.f32 %v1336, %v1350
    %1353 = vset.pattern.permute.xlu0 69
    %1354 = vperm.xlu0 %1353, %v72
    %v1355 = vpop.permute.xlu0 %1354
    %v1357 = vlaneseq
    %v1358 = vshrl.u32 %v1357, 7
    %v1359 = vsub.s32 5, %v1358
    %v1360 = vrot.slane %v1271, %v1359
    %v1361 = vlaneseq
    %v1362 = vshrl.u32 %v1361, 7
    %v1363 = vsub.s32 5, %v1362
    %v1364 = vrot.slane %v1272, %v1363
    %v1365 = vmul.f32 %v1355, %v1360
    %v1366 = vmul.f32 %v1355, %v1364
    %v1367 = vadd.f32 %v1351, %v1365
    %v1368 = vadd.f32 %v1352, %v1366
    %1369 = vset.pattern.permute.xlu0 70
    %1370 = vperm.xlu0 %1369, %v72
    %v1371 = vpop.permute.xlu0 %1370
    %v1373 = vlaneseq
    %v1374 = vshrl.u32 %v1373, 7
    %v1375 = vsub.s32 6, %v1374
    %v1376 = vrot.slane %v1271, %v1375
    %v1377 = vlaneseq
    %v1378 = vshrl.u32 %v1377, 7
    %v1379 = vsub.s32 6, %v1378
    %v1380 = vrot.slane %v1272, %v1379
    %v1381 = vmul.f32 %v1371, %v1376
    %v1382 = vmul.f32 %v1371, %v1380
    %v1383 = vadd.f32 %v1367, %v1381
    %v1384 = vadd.f32 %v1368, %v1382
    %1385 = vset.pattern.permute.xlu0 71
    %1386 = vperm.xlu0 %1385, %v72
    %v1387 = vpop.permute.xlu0 %1386
    %v1389 = vlaneseq
    %v1390 = vshrl.u32 %v1389, 7
    %v1391 = vsub.s32 7, %v1390
    %v1392 = vrot.slane %v1271, %v1391
    %v1393 = vlaneseq
    %v1394 = vshrl.u32 %v1393, 7
    %v1395 = vsub.s32 7, %v1394
    %v1396 = vrot.slane %v1272, %v1395
    %v1397 = vmul.f32 %v1387, %v1392
    %v1398 = vmul.f32 %v1387, %v1396
    %v1399 = vadd.f32 %v1383, %v1397
    %v1400 = vadd.f32 %v1384, %v1398
    %v1401 = vld [vmem:[%s2] sm:$0xff]
    %1403 = vset.pattern.permute.xlu0 0
    %1404 = vperm.xlu0 %1403, %v1401
    %v1405 = vpop.permute.xlu0 %1404
    %v1407 = vadd.f32 %v1399, %v1405
    %v1408 = vadd.f32 %v1400, %v1405
    %v1409 = vmax.f32 %v1407, 0.0
    %v1410 = vmax.f32 %v1408, 0.0
    %1411 = vst [vmem:[#allocation7] sm:$0xff] %v1409
    %1412 = vst [vmem:[#allocation7 + $0x8] sm:$0xff] %v1410
    // Predicated region
    $region26: #{tpu_custom_call.1} parent=1 // pred_check
      _
    $region27: #{tpu_custom_call.1} parent=1 // pred_check_branch
      %1414 = sbr.rel (0) target = $region29
    $region28: #{tpu_custom_call.1} parent=1 // pred_region
      %s1416 = ssub.s32 256, 256
      %1417 = vsyncadd [#allocation4], %s1416
      %s1419 = sshll.u32 [#allocation7], 4
      %s1420 = int_to_ptr.vmem [resolvable:$true] %s1419
      %1422 = dma.vmem_to_hbm [thread:$0]  %s1420, 256, %s4, [#allocation4]
    $region29: #{tpu_custom_call.1} parent=1 // pred_fallthru
      _
    // Predicated region
    $region30: #{tpu_custom_call.1} parent=1 // pred_check
      _
    $region31: #{tpu_custom_call.1} parent=1 // pred_check_branch
      %1424 = sbr.rel (0) target = $region33
    $region32: #{tpu_custom_call.1} parent=1 // pred_region
      %1425 = dma.done [#allocation4], 256
    $region33: #{tpu_custom_call.1} parent=1 // pred_fallthru
      _
    %1426 = vsyncpa [#allocation3], 1
    %1427 = vsyncpa [#allocation6], 1
    %1428 = vsyncpa [#allocation4], 1

</llo_original>
